<compile_context>
chip_gen: v7x
topology: tpu7x:2x2x1
jax: 0.10.0
libtpu: 0.0.40
codegen_flags: <defaults>
</compile_context>

<pallas_src>
import functools

import jax
import jax.numpy as jnp
from jax import lax
from jax.experimental import pallas as pl
from jax.experimental.pallas import tpu as pltpu


def _round_up(v, m):
    return (v + m - 1) // m * m


def _vmem_limit_bytes():
    # Per-generation VMEM cap: physical capacity minus ~16 MiB headroom for
    # compiler scratch/semaphores (v5e/v6e: 128 MiB -> 112 MiB, v7x: 64 -> 48 MiB).
    try:
        cap = int(pltpu.get_tpu_info().vmem_capacity_bytes)
    except Exception:
        cap = 64 * 1024 * 1024
    return max(32 * 1024 * 1024, cap - 16 * 1024 * 1024)


# Whole array resident in VMEM, single buffered (gridless call => no pipelining).
_VMEM_SPEC = pl.BlockSpec(memory_space=pltpu.MemorySpace.VMEM)


# ---------------- Fused Pallas kernel (entire forward) ----------------

def _fused_gcn_masker_kernel(
    x_ref,        # [N_pad, F_pad]    f32  node features (zero padded)
    a_ref,        # [N_pad, N_pad]    f32  sym-normalized adjacency (+ self loops)
    eidx_ref,     # [1, 2*E_pad]      i32  packed [row | col] endpoints, -1 = pad
    pbn_ref,      # [11, P_pad]       f32  packed BN gamma/beta + conv biases
    wf_ref,       # [F_pad, H_pad]    bf16 conv_feat weight (gfn: no bias/prop)
    w_ref,        # [3, H_pad, H_pad] bf16 GCNConv weights
    o_ref,        # [1, E_pad]        f32  sigmoid(inner product) edge scores
    *, n_real, n_pad, f_pad, h_pad, e_pad,
):
    f32, bf16 = jnp.float32, jnp.bfloat16
    inv_n = 1.0 / float(n_real)

    # Rows >= n_real are zero padding; exclude them from BatchNorm statistics.
    row_mask = (lax.broadcasted_iota(jnp.int32, (n_pad, 1), 0) < n_real).astype(f32)

    def bn(x, g, b):
        # Training-mode BatchNorm1d (biased variance), two-pass for stability.
        mean = jnp.sum(x * row_mask, axis=0, keepdims=True) * inv_n
        xc = (x - mean) * row_mask
        var = jnp.sum(xc * xc, axis=0, keepdims=True) * inv_n
        return g * (x - mean) * lax.rsqrt(var + 1e-5) + b

    a = a_ref[...]                       # [N_pad, N_pad] f32
    x = x_ref[...]                       # [N_pad, F_pad] f32

    # bn_feat -> conv_feat (gfn=True: pure x @ W, no bias, no propagation) -> ReLU.
    x = bn(x, pbn_ref[0:1, :f_pad], pbn_ref[1:2, :f_pad])
    x = jnp.dot(x.astype(bf16), wf_ref[...], preferred_element_type=f32)
    x = jnp.maximum(x, 0.0)

    # 3 x (BN -> GCNConv); ReLU after layers 0 and 1 only.
    for i in range(3):
        g = pbn_ref[2 + 3 * i: 3 + 3 * i, :h_pad]
        b = pbn_ref[3 + 3 * i: 4 + 3 * i, :h_pad]
        bias = pbn_ref[4 + 3 * i: 5 + 3 * i, :h_pad]
        x = bn(x, g, b)
        xw = jnp.dot(x.astype(bf16), w_ref[i], preferred_element_type=f32)
        x = jnp.dot(a, xw, preferred_element_type=f32) + bias      # f32 propagation
        if i != 2:
            x = jnp.maximum(x, 0.0)

    # inner_product_score: gather both endpoints of every edge with ONE fused MXU
    # matmul against an in-register one-hot selection (exact f32 gather), landing
    # directly lane-dense as [H_pad, 2*E_pad]; then a sublane reduction + sigmoid.
    idx = eidx_ref[...]                                             # [1, 2*E_pad]
    sel = (lax.broadcasted_iota(jnp.int32, (n_pad, 2 * e_pad), 0) == idx).astype(f32)
    x_t = x.T                                                       # [H_pad, N_pad] (small)
    gath = jnp.dot(x_t, sel, preferred_element_type=f32)            # [H_pad, 2*E_pad]
    score = jnp.sum(gath[:, :e_pad] * gath[:, e_pad:], axis=0, keepdims=True)
    o_ref[...] = jax.nn.sigmoid(score)


# ---------------- Glue (plain JAX) ----------------

def build_norm_adj(edge_index, num_nodes, n_pad):
    # GCN symmetric normalization with self-loops (edge_norm=True, improved=False).
    row, col = edge_index[0], edge_index[1]
    loop = jnp.arange(num_nodes, dtype=edge_index.dtype)
    row = jnp.concatenate([row, loop])
    col = jnp.concatenate([col, loop])
    ew = jnp.ones(row.shape[0], dtype=jnp.float32)
    deg = jnp.zeros((num_nodes,), jnp.float32).at[row].add(ew)
    dinv = jnp.where(deg > 0, lax.rsqrt(deg), 0.0)
    norm = dinv[row] * ew * dinv[col]
    # out[dst] = sum over edges (src -> dst) of norm * x[src]  =>  A_hat[dst, src]
    return jnp.zeros((n_pad, n_pad), jnp.float32).at[col, row].add(norm)


def init_params(key, num_features, hidden, num_conv_layers=3):
    keys = jax.random.split(key, 2 + num_conv_layers)

    def glorot(k, shape):
        fan_in, fan_out = shape
        scale = jnp.sqrt(6.0 / (fan_in + fan_out))
        return jax.random.uniform(k, shape, jnp.float32, -scale, scale)

    return {
        "bn_feat_g": jnp.ones((num_features,), jnp.float32),
        "bn_feat_b": jnp.full((num_features,), 1e-4, jnp.float32),
        "w_feat": glorot(keys[0], (num_features, hidden)),
        "bn_g": [jnp.ones((hidden,), jnp.float32) for _ in range(num_conv_layers)],
        "bn_b": [jnp.full((hidden,), 1e-4, jnp.float32) for _ in range(num_conv_layers)],
        "w": [glorot(keys[1 + i], (hidden, hidden)) for i in range(num_conv_layers)],
        "b": [jnp.zeros((hidden,), jnp.float32) for _ in range(num_conv_layers)],
    }


def gcn_masker_forward(x, edge_index, params):
    n, f = x.shape
    e = edge_index.shape[1]
    h = params["w_feat"].shape[1]

    n_pad = _round_up(n, 128)
    f_pad = _round_up(f, 128)
    h_pad = _round_up(h, 128)
    e_pad = _round_up(e, 128)
    p_pad = max(f_pad, h_pad)

    f32, bf16 = jnp.float32, jnp.bfloat16

    # Dense normalized adjacency in f32 (propagation precision), zero padded.
    a_hat = build_norm_adj(edge_index, n, n_pad)

    # Node features, zero padded.
    xp = jnp.zeros((n_pad, f_pad), f32).at[:n, :f].set(x.astype(f32))

    # Edge endpoints packed lane-dense as [row | col]; -1 marks padding edges
    # (matches no node -> zero selection column -> score sliced off below).
    row = edge_index[0].astype(jnp.int32)
    col = edge_index[1].astype(jnp.int32)
    eidx = jnp.full((2 * e_pad,), -1, jnp.int32)
    eidx = eidx.at[:e].set(row).at[e_pad:e_pad + e].set(col).reshape(1, 2 * e_pad)

    # Pack the 11 tiny BN / bias rows into one array (one DMA instead of 13).
    pbn = jnp.zeros((11, p_pad), f32)
    pbn = pbn.at[0, :f].set(params["bn_feat_g"]).at[1, :f].set(params["bn_feat_b"])
    for i in range(3):
        pbn = pbn.at[2 + 3 * i, :h].set(params["bn_g"][i])
        pbn = pbn.at[3 + 3 * i, :h].set(params["bn_b"][i])
        pbn = pbn.at[4 + 3 * i, :h].set(params["b"][i])

    # Matmul weights in bf16 (cast before padding: no f32 padded HBM round-trip).
    wf = jnp.zeros((f_pad, h_pad), bf16).at[:f, :h].set(params["w_feat"].astype(bf16))
    w_stack = jnp.zeros((3, h_pad, h_pad), bf16)
    for i in range(3):
        w_stack = w_stack.at[i, :h, :h].set(params["w"][i].astype(bf16))

    args = (xp, a_hat, eidx, pbn, wf, w_stack)

    flops = (
        2 * n_pad * f_pad * h_pad
        + 3 * (2 * n_pad * h_pad * h_pad + 2 * n_pad * n_pad * h_pad)
        + 2 * h_pad * n_pad * (2 * e_pad)
        + 2 * e_pad * h_pad
    )
    bytes_accessed = sum(int(a.size) * a.dtype.itemsize for a in args) + 4 * e_pad
    cost = pl.CostEstimate(
        flops=int(flops),
        transcendentals=int(e_pad + f_pad + 3 * h_pad),
        bytes_accessed=int(bytes_accessed),
    )

    kernel = functools.partial(
        _fused_gcn_masker_kernel,
        n_real=n, n_pad=n_pad, f_pad=f_pad, h_pad=h_pad, e_pad=e_pad,
    )

    out = pl.pallas_call(
        kernel,
        out_shape=jax.ShapeDtypeStruct((1, e_pad), f32),
        in_specs=[_VMEM_SPEC] * len(args),
        out_specs=_VMEM_SPEC,
        compiler_params=pltpu.CompilerParams(vmem_limit_bytes=_vmem_limit_bytes()),
        cost_estimate=cost,
    )(*args)
    return out[0, :e]


# ---------------- Pure-JAX reference (f32) for sanity check ----------------

def _reference_forward(x, edge_index, params):
    n = x.shape[0]
    row, col = edge_index[0], edge_index[1]
    loop = jnp.arange(n, dtype=edge_index.dtype)
    r2 = jnp.concatenate([row, loop])
    c2 = jnp.concatenate([col, loop])
    deg = jnp.zeros((n,), jnp.float32).at[r2].add(1.0)
    dinv = 1.0 / jnp.sqrt(deg)
    norm = dinv[r2] * dinv[c2]
    a = jnp.zeros((n, n), jnp.float32).at[c2, r2].add(norm)

    def bn(hdd, g, b):
        m = hdd.mean(0, keepdims=True)
        v = ((hdd - m) ** 2).mean(0, keepdims=True)
        return g[None] * (hdd - m) / jnp.sqrt(v + 1e-5) + b[None]

    hdd = bn(x, params["bn_feat_g"], params["bn_feat_b"])
    hdd = jnp.maximum(hdd @ params["w_feat"], 0.0)
    for i in range(3):
        hdd = bn(hdd, params["bn_g"][i], params["bn_b"][i])
        hdd = a @ (hdd @ params["w"][i]) + params["b"][i][None]
        if i != 2:
            hdd = jnp.maximum(hdd, 0.0)
    s = jnp.sum(hdd[row] * hdd[col], axis=1)
    return jax.nn.sigmoid(s)


if __name__ == "__main__":
    key = jax.random.PRNGKey(0)
    k_feat, k_param = jax.random.split(key)

    num_nodes = 16
    num_features = 8
    hidden = 32

    # Node features.
    x = jax.random.normal(k_feat, (num_nodes, num_features), jnp.float32)

    # Bidirectional ring graph: 32 directed edges.
    src = jnp.arange(num_nodes, dtype=jnp.int32)
    dst = jnp.roll(src, -1)
    edge_index = jnp.stack(
        [jnp.concatenate([src, dst]), jnp.concatenate([dst, src])], axis=0
    )  # [2, E], E = 32

    params = init_params(k_param, num_features, hidden)

    fwd = jax.jit(gcn_masker_forward)
    link_score = fwd(x, edge_index, params)
    jax.block_until_ready(link_score)

    assert link_score.shape == (edge_index.shape[1],)
    assert bool(jnp.all(jnp.isfinite(link_score)))

    ref = _reference_forward(x, edge_index, params)
    max_err = float(jnp.max(jnp.abs(link_score - ref)))
    assert max_err < 0.1, f"mismatch vs reference: {max_err}"

    print("KERNEL_OK")
</pallas_src>

<mosaic_0001>
module attributes {stable_mosaic.version = 11 : i64} {
  func.func private @main(%arg0: i32) attributes {dimension_semantics = [#tpu.dimension_semantics<core_parallel>], iteration_bounds = array<i64: 2>, tpu.core_type = #tpu.core_type<sc_scalar_subcore>, window_params = []} {
    return
  }
}

module attributes {stable_mosaic.version = 11 : i64} {
  func.func private @main(%arg0: i32) attributes {dimension_semantics = [#tpu.dimension_semantics<core_parallel>], iteration_bounds = array<i64: 2>, tpu.core_type = #tpu.core_type<sc_scalar_subcore>, window_params = []} {
    return
  }
}

module attributes {stable_mosaic.version = 11 : i64} {
  func.func @_fused_gcn_masker_kernel(%arg0: memref<128x128xf32, #tpu.memory_space<vmem>>, %arg1: memref<128x128xf32, #tpu.memory_space<vmem>>, %arg2: memref<1x256xi32, #tpu.memory_space<vmem>>, %arg3: memref<11x128xf32, #tpu.memory_space<vmem>>, %arg4: memref<128x128xbf16, #tpu.memory_space<vmem>>, %arg5: memref<3x128x128xbf16, #tpu.memory_space<vmem>>, %arg6: memref<1x128xf32, #tpu.memory_space<vmem>>) attributes {dimension_semantics = [], scalar_prefetch = 0 : i64, scratch_operands = 0 : i64, tpu.core_type = #tpu.core_type<tc>} {
    %0 = tpu.iota {dimensions = array<i32: 0>} : vector<128x1xi32>
    %c16_i32 = arith.constant 16 : i32
    %1 = vector.broadcast %c16_i32 : i32 to vector<128x1xi32>
    %2 = arith.cmpi slt, %0, %1 : vector<128x1xi32>
    %3 = arith.extui %2 : vector<128x1xi1> to vector<128x1xi32>
    %4 = arith.sitofp %3 : vector<128x1xi32> to vector<128x1xf32>
    %c0 = arith.constant 0 : index
    %c0_0 = arith.constant 0 : index
    %5 = vector.load %arg1[%c0, %c0_0] : memref<128x128xf32, #tpu.memory_space<vmem>>, vector<128x128xf32>
    %c0_1 = arith.constant 0 : index
    %c0_2 = arith.constant 0 : index
    %6 = vector.load %arg0[%c0_1, %c0_2] : memref<128x128xf32, #tpu.memory_space<vmem>>, vector<128x128xf32>
    %c0_3 = arith.constant 0 : index
    %c0_4 = arith.constant 0 : index
    %7 = vector.load %arg3[%c0_3, %c0_4] : memref<11x128xf32, #tpu.memory_space<vmem>>, vector<1x128xf32>
    %c1 = arith.constant 1 : index
    %c0_5 = arith.constant 0 : index
    %8 = vector.load %arg3[%c1, %c0_5] : memref<11x128xf32, #tpu.memory_space<vmem>>, vector<1x128xf32>
    %9 = vector.broadcast %4 : vector<128x1xf32> to vector<128x128xf32>
    %10 = arith.mulf %6, %9 : vector<128x128xf32>
    %cst = arith.constant dense<0.000000e+00> : vector<128xf32>
    %11 = vector.multi_reduction <add>, %10, %cst [0] : vector<128x128xf32> to vector<128xf32>
    %12 = vector.shape_cast %11 : vector<128xf32> to vector<1x128xf32>
    %cst_6 = arith.constant 6.250000e-02 : f32
    %13 = vector.broadcast %cst_6 : f32 to vector<1x128xf32>
    %14 = arith.mulf %12, %13 : vector<1x128xf32>
    %15 = vector.broadcast %14 : vector<1x128xf32> to vector<128x128xf32>
    %16 = arith.subf %6, %15 : vector<128x128xf32>
    %17 = vector.broadcast %4 : vector<128x1xf32> to vector<128x128xf32>
    %18 = arith.mulf %16, %17 : vector<128x128xf32>
    %19 = arith.mulf %18, %18 : vector<128x128xf32>
    %cst_7 = arith.constant dense<0.000000e+00> : vector<128xf32>
    %20 = vector.multi_reduction <add>, %19, %cst_7 [0] : vector<128x128xf32> to vector<128xf32>
    %21 = vector.shape_cast %20 : vector<128xf32> to vector<1x128xf32>
    %cst_8 = arith.constant 6.250000e-02 : f32
    %22 = vector.broadcast %cst_8 : f32 to vector<1x128xf32>
    %23 = arith.mulf %21, %22 : vector<1x128xf32>
    %24 = vector.broadcast %14 : vector<1x128xf32> to vector<128x128xf32>
    %25 = arith.subf %6, %24 : vector<128x128xf32>
    %26 = vector.broadcast %7 : vector<1x128xf32> to vector<128x128xf32>
    %27 = arith.mulf %26, %25 : vector<128x128xf32>
    %cst_9 = arith.constant 9.99999974E-6 : f32
    %28 = vector.broadcast %cst_9 : f32 to vector<1x128xf32>
    %29 = arith.addf %23, %28 : vector<1x128xf32>
    %30 = math.rsqrt %29 : vector<1x128xf32>
    %31 = vector.broadcast %30 : vector<1x128xf32> to vector<128x128xf32>
    %32 = arith.mulf %27, %31 : vector<128x128xf32>
    %33 = vector.broadcast %8 : vector<1x128xf32> to vector<128x128xf32>
    %34 = arith.addf %32, %33 : vector<128x128xf32>
    %35 = arith.truncf %34 : vector<128x128xf32> to vector<128x128xbf16>
    %c0_10 = arith.constant 0 : index
    %c0_11 = arith.constant 0 : index
    %36 = vector.load %arg4[%c0_10, %c0_11] : memref<128x128xbf16, #tpu.memory_space<vmem>>, vector<128x128xbf16>
    %cst_12 = arith.constant dense<0.000000e+00> : vector<128x128xf32>
    %37 = tpu.matmul %35, %36, %cst_12 {dimension_numbers = #tpu.dot_dimension_numbers<[1], [0], [0], [1], [0, 0, 1, 1], [], []>} : vector<128x128xbf16>, vector<128x128xbf16>, vector<128x128xf32> -> vector<128x128xf32>
    %cst_13 = arith.constant 0.000000e+00 : f32
    %38 = vector.broadcast %cst_13 : f32 to vector<128x128xf32>
    %39 = arith.maximumf %37, %38 : vector<128x128xf32>
    %c2 = arith.constant 2 : index
    %c0_14 = arith.constant 0 : index
    %40 = vector.load %arg3[%c2, %c0_14] : memref<11x128xf32, #tpu.memory_space<vmem>>, vector<1x128xf32>
    %c3 = arith.constant 3 : index
    %c0_15 = arith.constant 0 : index
    %41 = vector.load %arg3[%c3, %c0_15] : memref<11x128xf32, #tpu.memory_space<vmem>>, vector<1x128xf32>
    %c4 = arith.constant 4 : index
    %c0_16 = arith.constant 0 : index
    %42 = vector.load %arg3[%c4, %c0_16] : memref<11x128xf32, #tpu.memory_space<vmem>>, vector<1x128xf32>
    %43 = vector.broadcast %4 : vector<128x1xf32> to vector<128x128xf32>
    %44 = arith.mulf %39, %43 : vector<128x128xf32>
    %cst_17 = arith.constant dense<0.000000e+00> : vector<128xf32>
    %45 = vector.multi_reduction <add>, %44, %cst_17 [0] : vector<128x128xf32> to vector<128xf32>
    %46 = vector.shape_cast %45 : vector<128xf32> to vector<1x128xf32>
    %cst_18 = arith.constant 6.250000e-02 : f32
    %47 = vector.broadcast %cst_18 : f32 to vector<1x128xf32>
    %48 = arith.mulf %46, %47 : vector<1x128xf32>
    %49 = vector.broadcast %48 : vector<1x128xf32> to vector<128x128xf32>
    %50 = arith.subf %39, %49 : vector<128x128xf32>
    %51 = vector.broadcast %4 : vector<128x1xf32> to vector<128x128xf32>
    %52 = arith.mulf %50, %51 : vector<128x128xf32>
    %53 = arith.mulf %52, %52 : vector<128x128xf32>
    %cst_19 = arith.constant dense<0.000000e+00> : vector<128xf32>
    %54 = vector.multi_reduction <add>, %53, %cst_19 [0] : vector<128x128xf32> to vector<128xf32>
    %55 = vector.shape_cast %54 : vector<128xf32> to vector<1x128xf32>
    %cst_20 = arith.constant 6.250000e-02 : f32
    %56 = vector.broadcast %cst_20 : f32 to vector<1x128xf32>
    %57 = arith.mulf %55, %56 : vector<1x128xf32>
    %58 = vector.broadcast %48 : vector<1x128xf32> to vector<128x128xf32>
    %59 = arith.subf %39, %58 : vector<128x128xf32>
    %60 = vector.broadcast %40 : vector<1x128xf32> to vector<128x128xf32>
    %61 = arith.mulf %60, %59 : vector<128x128xf32>
    %cst_21 = arith.constant 9.99999974E-6 : f32
    %62 = vector.broadcast %cst_21 : f32 to vector<1x128xf32>
    %63 = arith.addf %57, %62 : vector<1x128xf32>
    %64 = math.rsqrt %63 : vector<1x128xf32>
    %65 = vector.broadcast %64 : vector<1x128xf32> to vector<128x128xf32>
    %66 = arith.mulf %61, %65 : vector<128x128xf32>
    %67 = vector.broadcast %41 : vector<1x128xf32> to vector<128x128xf32>
    %68 = arith.addf %66, %67 : vector<128x128xf32>
    %69 = arith.truncf %68 : vector<128x128xf32> to vector<128x128xbf16>
    %c0_22 = arith.constant 0 : index
    %c0_23 = arith.constant 0 : index
    %c0_24 = arith.constant 0 : index
    %70 = vector.load %arg5[%c0_22, %c0_23, %c0_24] : memref<3x128x128xbf16, #tpu.memory_space<vmem>>, vector<1x128x128xbf16>
    %71 = vector.shape_cast %70 : vector<1x128x128xbf16> to vector<128x128xbf16>
    %cst_25 = arith.constant dense<0.000000e+00> : vector<128x128xf32>
    %72 = tpu.matmul %69, %71, %cst_25 {dimension_numbers = #tpu.dot_dimension_numbers<[1], [0], [0], [1], [0, 0, 1, 1], [], []>} : vector<128x128xbf16>, vector<128x128xbf16>, vector<128x128xf32> -> vector<128x128xf32>
    %cst_26 = arith.constant dense<0.000000e+00> : vector<128x128xf32>
    %73 = tpu.matmul %5, %72, %cst_26 {dimension_numbers = #tpu.dot_dimension_numbers<[1], [0], [0], [1], [0, 0, 1, 1], [], []>} : vector<128x128xf32>, vector<128x128xf32>, vector<128x128xf32> -> vector<128x128xf32>
    %74 = vector.broadcast %42 : vector<1x128xf32> to vector<128x128xf32>
    %75 = arith.addf %73, %74 : vector<128x128xf32>
    %cst_27 = arith.constant 0.000000e+00 : f32
    %76 = vector.broadcast %cst_27 : f32 to vector<128x128xf32>
    %77 = arith.maximumf %75, %76 : vector<128x128xf32>
    %c5 = arith.constant 5 : index
    %c0_28 = arith.constant 0 : index
    %78 = vector.load %arg3[%c5, %c0_28] : memref<11x128xf32, #tpu.memory_space<vmem>>, vector<1x128xf32>
    %c6 = arith.constant 6 : index
    %c0_29 = arith.constant 0 : index
    %79 = vector.load %arg3[%c6, %c0_29] : memref<11x128xf32, #tpu.memory_space<vmem>>, vector<1x128xf32>
    %c7 = arith.constant 7 : index
    %c0_30 = arith.constant 0 : index
    %80 = vector.load %arg3[%c7, %c0_30] : memref<11x128xf32, #tpu.memory_space<vmem>>, vector<1x128xf32>
    %81 = vector.broadcast %4 : vector<128x1xf32> to vector<128x128xf32>
    %82 = arith.mulf %77, %81 : vector<128x128xf32>
    %cst_31 = arith.constant dense<0.000000e+00> : vector<128xf32>
    %83 = vector.multi_reduction <add>, %82, %cst_31 [0] : vector<128x128xf32> to vector<128xf32>
    %84 = vector.shape_cast %83 : vector<128xf32> to vector<1x128xf32>
    %cst_32 = arith.constant 6.250000e-02 : f32
    %85 = vector.broadcast %cst_32 : f32 to vector<1x128xf32>
    %86 = arith.mulf %84, %85 : vector<1x128xf32>
    %87 = vector.broadcast %86 : vector<1x128xf32> to vector<128x128xf32>
    %88 = arith.subf %77, %87 : vector<128x128xf32>
    %89 = vector.broadcast %4 : vector<128x1xf32> to vector<128x128xf32>
    %90 = arith.mulf %88, %89 : vector<128x128xf32>
    %91 = arith.mulf %90, %90 : vector<128x128xf32>
    %cst_33 = arith.constant dense<0.000000e+00> : vector<128xf32>
    %92 = vector.multi_reduction <add>, %91, %cst_33 [0] : vector<128x128xf32> to vector<128xf32>
    %93 = vector.shape_cast %92 : vector<128xf32> to vector<1x128xf32>
    %cst_34 = arith.constant 6.250000e-02 : f32
    %94 = vector.broadcast %cst_34 : f32 to vector<1x128xf32>
    %95 = arith.mulf %93, %94 : vector<1x128xf32>
    %96 = vector.broadcast %86 : vector<1x128xf32> to vector<128x128xf32>
    %97 = arith.subf %77, %96 : vector<128x128xf32>
    %98 = vector.broadcast %78 : vector<1x128xf32> to vector<128x128xf32>
    %99 = arith.mulf %98, %97 : vector<128x128xf32>
    %cst_35 = arith.constant 9.99999974E-6 : f32
    %100 = vector.broadcast %cst_35 : f32 to vector<1x128xf32>
    %101 = arith.addf %95, %100 : vector<1x128xf32>
    %102 = math.rsqrt %101 : vector<1x128xf32>
    %103 = vector.broadcast %102 : vector<1x128xf32> to vector<128x128xf32>
    %104 = arith.mulf %99, %103 : vector<128x128xf32>
    %105 = vector.broadcast %79 : vector<1x128xf32> to vector<128x128xf32>
    %106 = arith.addf %104, %105 : vector<128x128xf32>
    %107 = arith.truncf %106 : vector<128x128xf32> to vector<128x128xbf16>
    %c1_36 = arith.constant 1 : index
    %c0_37 = arith.constant 0 : index
    %c0_38 = arith.constant 0 : index
    %108 = vector.load %arg5[%c1_36, %c0_37, %c0_38] : memref<3x128x128xbf16, #tpu.memory_space<vmem>>, vector<1x128x128xbf16>
    %109 = vector.shape_cast %108 : vector<1x128x128xbf16> to vector<128x128xbf16>
    %cst_39 = arith.constant dense<0.000000e+00> : vector<128x128xf32>
    %110 = tpu.matmul %107, %109, %cst_39 {dimension_numbers = #tpu.dot_dimension_numbers<[1], [0], [0], [1], [0, 0, 1, 1], [], []>} : vector<128x128xbf16>, vector<128x128xbf16>, vector<128x128xf32> -> vector<128x128xf32>
    %cst_40 = arith.constant dense<0.000000e+00> : vector<128x128xf32>
    %111 = tpu.matmul %5, %110, %cst_40 {dimension_numbers = #tpu.dot_dimension_numbers<[1], [0], [0], [1], [0, 0, 1, 1], [], []>} : vector<128x128xf32>, vector<128x128xf32>, vector<128x128xf32> -> vector<128x128xf32>
    %112 = vector.broadcast %80 : vector<1x128xf32> to vector<128x128xf32>
    %113 = arith.addf %111, %112 : vector<128x128xf32>
    %cst_41 = arith.constant 0.000000e+00 : f32
    %114 = vector.broadcast %cst_41 : f32 to vector<128x128xf32>
    %115 = arith.maximumf %113, %114 : vector<128x128xf32>
    %c8 = arith.constant 8 : index
    %c0_42 = arith.constant 0 : index
    %116 = vector.load %arg3[%c8, %c0_42] : memref<11x128xf32, #tpu.memory_space<vmem>>, vector<1x128xf32>
    %c9 = arith.constant 9 : index
    %c0_43 = arith.constant 0 : index
    %117 = vector.load %arg3[%c9, %c0_43] : memref<11x128xf32, #tpu.memory_space<vmem>>, vector<1x128xf32>
    %c10 = arith.constant 10 : index
    %c0_44 = arith.constant 0 : index
    %118 = vector.load %arg3[%c10, %c0_44] : memref<11x128xf32, #tpu.memory_space<vmem>>, vector<1x128xf32>
    %119 = vector.broadcast %4 : vector<128x1xf32> to vector<128x128xf32>
    %120 = arith.mulf %115, %119 : vector<128x128xf32>
    %cst_45 = arith.constant dense<0.000000e+00> : vector<128xf32>
    %121 = vector.multi_reduction <add>, %120, %cst_45 [0] : vector<128x128xf32> to vector<128xf32>
    %122 = vector.shape_cast %121 : vector<128xf32> to vector<1x128xf32>
    %cst_46 = arith.constant 6.250000e-02 : f32
    %123 = vector.broadcast %cst_46 : f32 to vector<1x128xf32>
    %124 = arith.mulf %122, %123 : vector<1x128xf32>
    %125 = vector.broadcast %124 : vector<1x128xf32> to vector<128x128xf32>
    %126 = arith.subf %115, %125 : vector<128x128xf32>
    %127 = vector.broadcast %4 : vector<128x1xf32> to vector<128x128xf32>
    %128 = arith.mulf %126, %127 : vector<128x128xf32>
    %129 = arith.mulf %128, %128 : vector<128x128xf32>
    %cst_47 = arith.constant dense<0.000000e+00> : vector<128xf32>
    %130 = vector.multi_reduction <add>, %129, %cst_47 [0] : vector<128x128xf32> to vector<128xf32>
    %131 = vector.shape_cast %130 : vector<128xf32> to vector<1x128xf32>
    %cst_48 = arith.constant 6.250000e-02 : f32
    %132 = vector.broadcast %cst_48 : f32 to vector<1x128xf32>
    %133 = arith.mulf %131, %132 : vector<1x128xf32>
    %134 = vector.broadcast %124 : vector<1x128xf32> to vector<128x128xf32>
    %135 = arith.subf %115, %134 : vector<128x128xf32>
    %136 = vector.broadcast %116 : vector<1x128xf32> to vector<128x128xf32>
    %137 = arith.mulf %136, %135 : vector<128x128xf32>
    %cst_49 = arith.constant 9.99999974E-6 : f32
    %138 = vector.broadcast %cst_49 : f32 to vector<1x128xf32>
    %139 = arith.addf %133, %138 : vector<1x128xf32>
    %140 = math.rsqrt %139 : vector<1x128xf32>
    %141 = vector.broadcast %140 : vector<1x128xf32> to vector<128x128xf32>
    %142 = arith.mulf %137, %141 : vector<128x128xf32>
    %143 = vector.broadcast %117 : vector<1x128xf32> to vector<128x128xf32>
    %144 = arith.addf %142, %143 : vector<128x128xf32>
    %145 = arith.truncf %144 : vector<128x128xf32> to vector<128x128xbf16>
    %c2_50 = arith.constant 2 : index
    %c0_51 = arith.constant 0 : index
    %c0_52 = arith.constant 0 : index
    %146 = vector.load %arg5[%c2_50, %c0_51, %c0_52] : memref<3x128x128xbf16, #tpu.memory_space<vmem>>, vector<1x128x128xbf16>
    %147 = vector.shape_cast %146 : vector<1x128x128xbf16> to vector<128x128xbf16>
    %cst_53 = arith.constant dense<0.000000e+00> : vector<128x128xf32>
    %148 = tpu.matmul %145, %147, %cst_53 {dimension_numbers = #tpu.dot_dimension_numbers<[1], [0], [0], [1], [0, 0, 1, 1], [], []>} : vector<128x128xbf16>, vector<128x128xbf16>, vector<128x128xf32> -> vector<128x128xf32>
    %cst_54 = arith.constant dense<0.000000e+00> : vector<128x128xf32>
    %149 = tpu.matmul %5, %148, %cst_54 {dimension_numbers = #tpu.dot_dimension_numbers<[1], [0], [0], [1], [0, 0, 1, 1], [], []>} : vector<128x128xf32>, vector<128x128xf32>, vector<128x128xf32> -> vector<128x128xf32>
    %150 = vector.broadcast %118 : vector<1x128xf32> to vector<128x128xf32>
    %151 = arith.addf %149, %150 : vector<128x128xf32>
    %c0_55 = arith.constant 0 : index
    %c0_56 = arith.constant 0 : index
    %152 = vector.load %arg2[%c0_55, %c0_56] : memref<1x256xi32, #tpu.memory_space<vmem>>, vector<1x256xi32>
    %153 = tpu.iota {dimensions = array<i32: 0>} : vector<128x256xi32>
    %154 = vector.broadcast %152 : vector<1x256xi32> to vector<128x256xi32>
    %155 = arith.cmpi eq, %153, %154 : vector<128x256xi32>
    %156 = arith.extui %155 : vector<128x256xi1> to vector<128x256xi32>
    %157 = arith.sitofp %156 : vector<128x256xi32> to vector<128x256xf32>
    %158 = tpu.transpose %151, [1, 0] : vector<128x128xf32> -> vector<128x128xf32>
    %cst_57 = arith.constant dense<0.000000e+00> : vector<128x256xf32>
    %159 = tpu.matmul %158, %157, %cst_57 {dimension_numbers = #tpu.dot_dimension_numbers<[1], [0], [0], [1], [0, 0, 1, 1], [], []>} : vector<128x128xf32>, vector<128x256xf32>, vector<128x256xf32> -> vector<128x256xf32>
    %160 = vector.extract_strided_slice %159 {offsets = [0, 0], sizes = [128, 128], strides = [1, 1]} : vector<128x256xf32> to vector<128x128xf32>
    %161 = vector.extract_strided_slice %159 {offsets = [0, 128], sizes = [128, 128], strides = [1, 1]} : vector<128x256xf32> to vector<128x128xf32>
    %162 = arith.mulf %160, %161 : vector<128x128xf32>
    %cst_58 = arith.constant dense<0.000000e+00> : vector<128xf32>
    %163 = vector.multi_reduction <add>, %162, %cst_58 [0] : vector<128x128xf32> to vector<128xf32>
    %164 = vector.shape_cast %163 : vector<128xf32> to vector<1x128xf32>
    %165 = arith.negf %164 : vector<1x128xf32>
    %166 = math.exp %165 : vector<1x128xf32>
    %cst_59 = arith.constant 1.000000e+00 : f32
    %167 = vector.broadcast %cst_59 : f32 to vector<1x128xf32>
    %168 = arith.addf %167, %166 : vector<1x128xf32>
    %169 = arith.divf %167, %168 : vector<1x128xf32>
    %c0_60 = arith.constant 0 : index
    %c0_61 = arith.constant 0 : index
    %170 = vector.load %arg6[%c0_60, %c0_61] : memref<1x128xf32, #tpu.memory_space<vmem>>, vector<1x128xf32>
    tpu.vector_store %arg6[%c0_60, %c0_61], %169 {strides = array<i32>} : memref<1x128xf32, #tpu.memory_space<vmem>>, vector<1x128xf32>,
    return
  }
}

</mosaic_0001>

<llo_original>
// kernel: mul.1
$region0: #{mul.1}
  #allocation0 [shape = 's32[1]{0}', space=sflag, size = 0x4, scoped, tag = 'scoped memory for mul.1']
  %s0 = inlined_call_operand.vmem [shape: f32[48], index: 0, kind: input, shape index: {}]
  %s1 = inlined_call_operand.vmem [shape: f32[48], index: 1, kind: input, shape index: {}]
  %s2 = inlined_call_operand.vmem [shape: f32[48], index: 2, kind: output, shape index: {}]
  %v3 = vld [vmem:[%s0] sm:$0x1]
  %v4 = vld [vmem:[%s1] sm:$0x1]
  %5 = xla_tuple %v3, %v4
  %6 = xla_tuple %5
  %v7 = vmul.f32 %v3, %v4
  %8 = xla_tuple %v7
  %9 = vst [vmem:[%s2] sm:$0x1] %v7

// kernel: gcn_masker_forward.1
$region0: #{gcn_masker_forward.1}
  #allocation0 [shape = 'u32[]', space=smem, size = 0x4, offset = 0x4, fixed_abs, tag = 'smem constant byte address 0x4 - core index']
  #allocation1 [shape = 'u32[144,128]{1,0:T(1,128)}', space=vmem, size = 0x12000, scoped, tag = 'internal scratch']
  %s0 = inlined_call_operand.vmem [shape: f32[128,128], index: 0, kind: input, shape index: {}]
  %s1 = inlined_call_operand.hbm [shape: f32[128,128], index: 1, kind: input, shape index: {}]
  %s2 = inlined_call_operand.vmem [shape: s32[1,256], index: 2, kind: input, shape index: {}]
  %s3 = inlined_call_operand.vmem [shape: f32[11,128], index: 3, kind: input, shape index: {}]
  %s4 = inlined_call_operand.vmem [shape: bf16[128,128], index: 4, kind: input, shape index: {}]
  %s5 = inlined_call_operand.vmem [shape: bf16[3,128,128], index: 5, kind: input, shape index: {}]
  %s6 = inlined_call_operand.vmem [shape: f32[1,128], index: 6, kind: output, shape index: {}]
  %s7 = sld [smem:[#allocation0]]
  $region38: #{gcn_masker_forward.1} parent=0
    _
  %s9 = ssub.s32 1, %s7
  %s10 = scalar_select 0, %s9, %s7
  $region1: #{gcn_masker_forward.1} parent=0
    #allocation2 [shape = 'u8[65536]{0}', space=vmem, size = 0x10000, scoped, tag = 'input window, operand 1, single buffered']
    #allocation3 [shape = 's32[1]{0}', space=sflag, size = 0x4, scoped, tag = 'scoped memory for gcn_masker_forward.1']
    %11 = vsyncpa [#allocation3], 0
    // Predicated region
    $region2: #{gcn_masker_forward.1} parent=1 // pred_check
      _
    $region3: #{gcn_masker_forward.1} parent=1 // pred_check_branch
      %13 = sbr.rel (0) target = $region5
    $region4: #{gcn_masker_forward.1} parent=1 // pred_region
      _
    $region5: #{gcn_masker_forward.1} parent=1 // pred_fallthru
      _
    // Predicated region
    $region6: #{gcn_masker_forward.1} parent=1 // pred_check
      _
    $region7: #{gcn_masker_forward.1} parent=1 // pred_check_branch
      %15 = sbr.rel (0) target = $region9
    $region8: #{gcn_masker_forward.1} parent=1 // pred_region
      %s17 = ssub.s32 2048, 2048
      %18 = vsyncadd [#allocation3], %s17
      %s19 = sshll.u32 [#allocation2], 4
      %s20 = int_to_ptr.vmem [resolvable:$true] %s19
      %25 = dma.hbm_to_vmem [thread:$0]  %s1, 2048, %s20, [#allocation3], 128, 128, 8
    $region9: #{gcn_masker_forward.1} parent=1 // pred_fallthru
      _
    // Predicated region
    $region10: #{gcn_masker_forward.1} parent=1 // pred_check
      _
    $region11: #{gcn_masker_forward.1} parent=1 // pred_check_branch
      %27 = sbr.rel (0) target = $region13
    $region12: #{gcn_masker_forward.1} parent=1 // pred_region
      _
    $region13: #{gcn_masker_forward.1} parent=1 // pred_fallthru
      _
    // Predicated region
    $region14: #{gcn_masker_forward.1} parent=1 // pred_check
      _
    $region15: #{gcn_masker_forward.1} parent=1 // pred_check_branch
      %29 = sbr.rel (0) target = $region17
    $region16: #{gcn_masker_forward.1} parent=1 // pred_region
      _
    $region17: #{gcn_masker_forward.1} parent=1 // pred_fallthru
      _
    // Predicated region
    $region18: #{gcn_masker_forward.1} parent=1 // pred_check
      _
    $region19: #{gcn_masker_forward.1} parent=1 // pred_check_branch
      %31 = sbr.rel (0) target = $region21
    $region20: #{gcn_masker_forward.1} parent=1 // pred_region
      _
    $region21: #{gcn_masker_forward.1} parent=1 // pred_fallthru
      _
    // Predicated region
    $region22: #{gcn_masker_forward.1} parent=1 // pred_check
      _
    $region23: #{gcn_masker_forward.1} parent=1 // pred_check_branch
      %33 = sbr.rel (0) target = $region25
    $region24: #{gcn_masker_forward.1} parent=1 // pred_region
      _
    $region25: #{gcn_masker_forward.1} parent=1 // pred_fallthru
      _
    // Predicated region
    $region26: #{gcn_masker_forward.1} parent=1 // pred_check
      _
    $region27: #{gcn_masker_forward.1} parent=1 // pred_check_branch
      %35 = sbr.rel (0) target = $region29
    $region28: #{gcn_masker_forward.1} parent=1 // pred_region
      %36 = dma.done [#allocation3], 2048
    $region29: #{gcn_masker_forward.1} parent=1 // pred_fallthru
      _
    %v38 = vlaneseq
    %v39 = vshrl.u32 %v38, 7
    %v40 = vadd.s32 %v39, 8
    %v41 = vadd.s32 %v39, 16
    %v42 = vadd.s32 %v39, 24
    %v43 = vadd.s32 %v39, 32
    %v44 = vadd.s32 %v39, 40
    %v45 = vadd.s32 %v39, 48
    %v46 = vadd.s32 %v39, 56
    %v47 = vadd.s32 %v39, 64
    %v48 = vadd.s32 %v39, 72
    %v49 = vadd.s32 %v39, 80
    %v50 = vadd.s32 %v39, 88
    %v51 = vadd.s32 %v39, 96
    %v52 = vadd.s32 %v39, 104
    %v53 = vadd.s32 %v39, 112
    %v54 = vadd.s32 %v39, 120
    %vm55 = vcmp.lt.s32.totalorder %v39, 16
    %vm56 = vcmp.lt.s32.totalorder %v40, 16
    %vm57 = vcmp.lt.s32.totalorder %v41, 16
    %vm58 = vcmp.lt.s32.totalorder %v42, 16
    %vm59 = vcmp.lt.s32.totalorder %v43, 16
    %vm60 = vcmp.lt.s32.totalorder %v44, 16
    %vm61 = vcmp.lt.s32.totalorder %v45, 16
    %vm62 = vcmp.lt.s32.totalorder %v46, 16
    %vm63 = vcmp.lt.s32.totalorder %v47, 16
    %vm64 = vcmp.lt.s32.totalorder %v48, 16
    %vm65 = vcmp.lt.s32.totalorder %v49, 16
    %vm66 = vcmp.lt.s32.totalorder %v50, 16
    %vm67 = vcmp.lt.s32.totalorder %v51, 16
    %vm68 = vcmp.lt.s32.totalorder %v52, 16
    %vm69 = vcmp.lt.s32.totalorder %v53, 16
    %vm70 = vcmp.lt.s32.totalorder %v54, 16
    %v71 = vsel %vm55, 1, 0
    %v72 = vsel %vm56, 1, 0
    %v73 = vsel %vm57, 1, 0
    %v74 = vsel %vm58, 1, 0
    %v75 = vsel %vm59, 1, 0
    %v76 = vsel %vm60, 1, 0
    %v77 = vsel %vm61, 1, 0
    %v78 = vsel %vm62, 1, 0
    %v79 = vsel %vm63, 1, 0
    %v80 = vsel %vm64, 1, 0
    %v81 = vsel %vm65, 1, 0
    %v82 = vsel %vm66, 1, 0
    %v83 = vsel %vm67, 1, 0
    %v84 = vsel %vm68, 1, 0
    %v85 = vsel %vm69, 1, 0
    %v86 = vsel %vm70, 1, 0
    %v87 = vcvt.s32.f32 %v71
    %v88 = vcvt.s32.f32 %v72
    %v89 = vcvt.s32.f32 %v73
    %v90 = vcvt.s32.f32 %v74
    %v91 = vcvt.s32.f32 %v75
    %v92 = vcvt.s32.f32 %v76
    %v93 = vcvt.s32.f32 %v77
    %v94 = vcvt.s32.f32 %v78
    %v95 = vcvt.s32.f32 %v79
    %v96 = vcvt.s32.f32 %v80
    %v97 = vcvt.s32.f32 %v81
    %v98 = vcvt.s32.f32 %v82
    %v99 = vcvt.s32.f32 %v83
    %v100 = vcvt.s32.f32 %v84
    %v101 = vcvt.s32.f32 %v85
    %v102 = vcvt.s32.f32 %v86
    %v103 = vld [vmem:[#allocation2] sm:$0xff]
    %v104 = vld [vmem:[#allocation2 + $0x8] sm:$0xff]
    %v105 = vld [vmem:[#allocation2 + $0x10] sm:$0xff]
    %v106 = vld [vmem:[#allocation2 + $0x18] sm:$0xff]
    %v107 = vld [vmem:[#allocation2 + $0x20] sm:$0xff]
    %v108 = vld [vmem:[#allocation2 + $0x28] sm:$0xff]
    %v109 = vld [vmem:[#allocation2 + $0x30] sm:$0xff]
    %v110 = vld [vmem:[#allocation2 + $0x38] sm:$0xff]
    %v111 = vld [vmem:[#allocation2 + $0x40] sm:$0xff]
    %v112 = vld [vmem:[#allocation2 + $0x48] sm:$0xff]
    %v113 = vld [vmem:[#allocation2 + $0x50] sm:$0xff]
    %v114 = vld [vmem:[#allocation2 + $0x58] sm:$0xff]
    %v115 = vld [vmem:[#allocation2 + $0x60] sm:$0xff]
    %v116 = vld [vmem:[#allocation2 + $0x68] sm:$0xff]
    %v117 = vld [vmem:[#allocation2 + $0x70] sm:$0xff]
    %v118 = vld [vmem:[#allocation2 + $0x78] sm:$0xff]
    %v119 = vld [vmem:[%s0] sm:$0xff]
    %v120 = vld [vmem:[%s0 + $0x8] sm:$0xff]
    %v121 = vld [vmem:[%s0 + $0x10] sm:$0xff]
    %v122 = vld [vmem:[%s0 + $0x18] sm:$0xff]
    %v123 = vld [vmem:[%s0 + $0x20] sm:$0xff]
    %v124 = vld [vmem:[%s0 + $0x28] sm:$0xff]
    %v125 = vld [vmem:[%s0 + $0x30] sm:$0xff]
    %v126 = vld [vmem:[%s0 + $0x38] sm:$0xff]
    %v127 = vld [vmem:[%s0 + $0x40] sm:$0xff]
    %v128 = vld [vmem:[%s0 + $0x48] sm:$0xff]
    %v129 = vld [vmem:[%s0 + $0x50] sm:$0xff]
    %v130 = vld [vmem:[%s0 + $0x58] sm:$0xff]
    %v131 = vld [vmem:[%s0 + $0x60] sm:$0xff]
    %v132 = vld [vmem:[%s0 + $0x68] sm:$0xff]
    %v133 = vld [vmem:[%s0 + $0x70] sm:$0xff]
    %v134 = vld [vmem:[%s0 + $0x78] sm:$0xff]
    %v135 = vld [vmem:[%s3] sm:$0x1]
    %v136 = vld [vmem:[%s3 + $0x1] sm:$0x1]
    %v137 = vmul.f32 %v119, %v87
    %v138 = vmul.f32 %v120, %v88
    %v139 = vmul.f32 %v121, %v89
    %v140 = vmul.f32 %v122, %v90
    %v141 = vmul.f32 %v123, %v91
    %v142 = vmul.f32 %v124, %v92
    %v143 = vmul.f32 %v125, %v93
    %v144 = vmul.f32 %v126, %v94
    %v145 = vmul.f32 %v127, %v95
    %v146 = vmul.f32 %v128, %v96
    %v147 = vmul.f32 %v129, %v97
    %v148 = vmul.f32 %v130, %v98
    %v149 = vmul.f32 %v131, %v99
    %v150 = vmul.f32 %v132, %v100
    %v151 = vmul.f32 %v133, %v101
    %v152 = vmul.f32 %v134, %v102
    %v153 = vadd.f32 %v137, %v138
    %v154 = vadd.f32 %v153, %v139
    %v155 = vadd.f32 %v154, %v140
    %v156 = vadd.f32 %v155, %v141
    %v157 = vadd.f32 %v156, %v142
    %v158 = vadd.f32 %v157, %v143
    %v159 = vadd.f32 %v158, %v144
    %v160 = vadd.f32 %v159, %v145
    %v161 = vadd.f32 %v160, %v146
    %v162 = vadd.f32 %v161, %v147
    %v163 = vadd.f32 %v162, %v148
    %v164 = vadd.f32 %v163, %v149
    %v165 = vadd.f32 %v164, %v150
    %v166 = vadd.f32 %v165, %v151
    %v167 = vadd.f32 %v166, %v152
    %v168 = vrot.slane %v167, 4
    %v169 = vadd.f32 %v167, %v168
    %v170 = vrot.slane %v169, 2
    %v171 = vadd.f32 %v169, %v170
    %v172 = vrot.slane %v171, 1
    %v173 = vadd.f32 %v171, %v172
    %v174 = vmul.f32 %v173, 0.0625
    %v175 = vsub.f32 %v119, %v174
    %v176 = vsub.f32 %v120, %v174
    %v177 = vsub.f32 %v121, %v174
    %v178 = vsub.f32 %v122, %v174
    %v179 = vsub.f32 %v123, %v174
    %v180 = vsub.f32 %v124, %v174
    %v181 = vsub.f32 %v125, %v174
    %v182 = vsub.f32 %v126, %v174
    %v183 = vsub.f32 %v127, %v174
    %v184 = vsub.f32 %v128, %v174
    %v185 = vsub.f32 %v129, %v174
    %v186 = vsub.f32 %v130, %v174
    %v187 = vsub.f32 %v131, %v174
    %v188 = vsub.f32 %v132, %v174
    %v189 = vsub.f32 %v133, %v174
    %v190 = vsub.f32 %v134, %v174
    %v191 = vmul.f32 %v175, %v87
    %v192 = vmul.f32 %v176, %v88
    %v193 = vmul.f32 %v177, %v89
    %v194 = vmul.f32 %v178, %v90
    %v195 = vmul.f32 %v179, %v91
    %v196 = vmul.f32 %v180, %v92
    %v197 = vmul.f32 %v181, %v93
    %v198 = vmul.f32 %v182, %v94
    %v199 = vmul.f32 %v183, %v95
    %v200 = vmul.f32 %v184, %v96
    %v201 = vmul.f32 %v185, %v97
    %v202 = vmul.f32 %v186, %v98
    %v203 = vmul.f32 %v187, %v99
    %v204 = vmul.f32 %v188, %v100
    %v205 = vmul.f32 %v189, %v101
    %v206 = vmul.f32 %v190, %v102
    %v207 = vmul.f32 %v191, %v191
    %v208 = vmul.f32 %v192, %v192
    %v209 = vmul.f32 %v193, %v193
    %v210 = vmul.f32 %v194, %v194
    %v211 = vmul.f32 %v195, %v195
    %v212 = vmul.f32 %v196, %v196
    %v213 = vmul.f32 %v197, %v197
    %v214 = vmul.f32 %v198, %v198
    %v215 = vmul.f32 %v199, %v199
    %v216 = vmul.f32 %v200, %v200
    %v217 = vmul.f32 %v201, %v201
    %v218 = vmul.f32 %v202, %v202
    %v219 = vmul.f32 %v203, %v203
    %v220 = vmul.f32 %v204, %v204
    %v221 = vmul.f32 %v205, %v205
    %v222 = vmul.f32 %v206, %v206
    %v223 = vadd.f32 %v207, %v208
    %v224 = vadd.f32 %v223, %v209
    %v225 = vadd.f32 %v224, %v210
    %v226 = vadd.f32 %v225, %v211
    %v227 = vadd.f32 %v226, %v212
    %v228 = vadd.f32 %v227, %v213
    %v229 = vadd.f32 %v228, %v214
    %v230 = vadd.f32 %v229, %v215
    %v231 = vadd.f32 %v230, %v216
    %v232 = vadd.f32 %v231, %v217
    %v233 = vadd.f32 %v232, %v218
    %v234 = vadd.f32 %v233, %v219
    %v235 = vadd.f32 %v234, %v220
    %v236 = vadd.f32 %v235, %v221
    %v237 = vadd.f32 %v236, %v222
    %v238 = vrot.slane %v237, 4
    %v239 = vadd.f32 %v237, %v238
    %v240 = vrot.slane %v239, 2
    %v241 = vadd.f32 %v239, %v240
    %v242 = vrot.slane %v241, 1
    %v243 = vadd.f32 %v241, %v242
    %v244 = vmul.f32 %v243, 0.0625
    %v245 = vlaneseq
    %v246 = vshrl.u32 %v245, 7
    %v247 = vsub.s32 0, %v246
    %v248 = vrot.slane %v135, %v247
    %v249 = vmul.f32 %v248, %v175
    %v250 = vmul.f32 %v248, %v176
    %v251 = vmul.f32 %v248, %v177
    %v252 = vmul.f32 %v248, %v178
    %v253 = vmul.f32 %v248, %v179
    %v254 = vmul.f32 %v248, %v180
    %v255 = vmul.f32 %v248, %v181
    %v256 = vmul.f32 %v248, %v182
    %v257 = vmul.f32 %v248, %v183
    %v258 = vmul.f32 %v248, %v184
    %v259 = vmul.f32 %v248, %v185
    %v260 = vmul.f32 %v248, %v186
    %v261 = vmul.f32 %v248, %v187
    %v262 = vmul.f32 %v248, %v188
    %v263 = vmul.f32 %v248, %v189
    %v264 = vmul.f32 %v248, %v190
    %v265 = vadd.f32 %v244, 1e-05
    %v266 = vrsqrt.pop %v265
    %v267 = vmul.f32 %v249, %v266
    %v268 = vmul.f32 %v250, %v266
    %v269 = vmul.f32 %v251, %v266
    %v270 = vmul.f32 %v252, %v266
    %v271 = vmul.f32 %v253, %v266
    %v272 = vmul.f32 %v254, %v266
    %v273 = vmul.f32 %v255, %v266
    %v274 = vmul.f32 %v256, %v266
    %v275 = vmul.f32 %v257, %v266
    %v276 = vmul.f32 %v258, %v266
    %v277 = vmul.f32 %v259, %v266
    %v278 = vmul.f32 %v260, %v266
    %v279 = vmul.f32 %v261, %v266
    %v280 = vmul.f32 %v262, %v266
    %v281 = vmul.f32 %v263, %v266
    %v282 = vmul.f32 %v264, %v266
    %v283 = vlaneseq
    %v284 = vshrl.u32 %v283, 7
    %v285 = vsub.s32 0, %v284
    %v286 = vrot.slane %v136, %v285
    %v287 = vadd.f32 %v267, %v286
    %v288 = vadd.f32 %v268, %v286
    %v289 = vadd.f32 %v269, %v286
    %v290 = vadd.f32 %v270, %v286
    %v291 = vadd.f32 %v271, %v286
    %v292 = vadd.f32 %v272, %v286
    %v293 = vadd.f32 %v273, %v286
    %v294 = vadd.f32 %v274, %v286
    %v295 = vadd.f32 %v275, %v286
    %v296 = vadd.f32 %v276, %v286
    %v297 = vadd.f32 %v277, %v286
    %v298 = vadd.f32 %v278, %v286
    %v299 = vadd.f32 %v279, %v286
    %v300 = vadd.f32 %v280, %v286
    %v301 = vadd.f32 %v281, %v286
    %v302 = vadd.f32 %v282, %v286
    %v303 = vpack.c.bf16 %v288, %v287
    %v304 = vpack.c.bf16 %v290, %v289
    %v305 = vpack.c.bf16 %v292, %v291
    %v306 = vpack.c.bf16 %v294, %v293
    %v307 = vpack.c.bf16 %v296, %v295
    %v308 = vpack.c.bf16 %v298, %v297
    %v309 = vpack.c.bf16 %v300, %v299
    %v310 = vpack.c.bf16 %v302, %v301
    %v311 = vld [vmem:[%s4] sm:$0xf]
    %v312 = vld [vmem:[%s4 + $0x4] sm:$0xf]
    %v313 = vld [vmem:[%s4 + $0x8] sm:$0xf]
    %v314 = vld [vmem:[%s4 + $0xc] sm:$0xf]
    %v315 = vld [vmem:[%s4 + $0x10] sm:$0xf]
    %v316 = vld [vmem:[%s4 + $0x14] sm:$0xf]
    %v317 = vld [vmem:[%s4 + $0x18] sm:$0xf]
    %v318 = vld [vmem:[%s4 + $0x1c] sm:$0xf]
    %v319 = vld [vmem:[%s4 + $0x20] sm:$0xf]
    %v320 = vld [vmem:[%s4 + $0x24] sm:$0xf]
    %v321 = vld [vmem:[%s4 + $0x28] sm:$0xf]
    %v322 = vld [vmem:[%s4 + $0x2c] sm:$0xf]
    %v323 = vld [vmem:[%s4 + $0x30] sm:$0xf]
    %v324 = vld [vmem:[%s4 + $0x34] sm:$0xf]
    %v325 = vld [vmem:[%s4 + $0x38] sm:$0xf]
    %v326 = vld [vmem:[%s4 + $0x3c] sm:$0xf]
    %v343 = vunpack.c.l.b16 %v311
    %v344 = vunpack.c.l.b16 %v312
    %v345 = vunpack.c.l.b16 %v313
    %v346 = vunpack.c.l.b16 %v314
    %v347 = vunpack.c.l.b16 %v315
    %v348 = vunpack.c.l.b16 %v316
    %v349 = vunpack.c.l.b16 %v317
    %v350 = vunpack.c.l.b16 %v318
    %v351 = vunpack.c.l.b16 %v319
    %v352 = vunpack.c.l.b16 %v320
    %v353 = vunpack.c.l.b16 %v321
    %v354 = vunpack.c.l.b16 %v322
    %v355 = vunpack.c.l.b16 %v323
    %v356 = vunpack.c.l.b16 %v324
    %v357 = vunpack.c.l.b16 %v325
    %v358 = vunpack.c.l.b16 %v326
    %v359 = vpack.c.b16 %v344, %v343
    %v360 = vpack.c.b16 %v346, %v345
    %v361 = vpack.c.b16 %v348, %v347
    %v362 = vpack.c.b16 %v350, %v349
    %v363 = vpack.c.b16 %v352, %v351
    %v364 = vpack.c.b16 %v354, %v353
    %v365 = vpack.c.b16 %v356, %v355
    %v366 = vpack.c.b16 %v358, %v357
    %375 = vmatprep.subr.bf16.mxu0 0
    %376 = vmatpush1.bf16.msra.mxu0 %v359
    %377 = vmatprep.subr.bf16.mxu0 0
    %378 = vmatpush1.bf16.msra.mxu0 %v360
    %379 = vmatprep.subr.bf16.mxu0 0
    %380 = vmatpush1.bf16.msra.mxu0 %v361
    %381 = vmatprep.subr.bf16.mxu0 0
    %382 = vmatpush1.bf16.msra.mxu0 %v362
    %383 = vmatprep.subr.bf16.mxu0 0
    %384 = vmatpush1.bf16.msra.mxu0 %v363
    %385 = vmatprep.subr.bf16.mxu0 0
    %386 = vmatpush1.bf16.msra.mxu0 %v364
    %387 = vmatprep.subr.bf16.mxu0 0
    %388 = vmatpush1.bf16.msra.mxu0 %v365
    %389 = vmatprep.subr.bf16.mxu0 0
    %390 = vmatpush1.bf16.msra.mxu0 %v366
    %391 = vmatprep.subr.bf16.mxu0 0
    %392 = vmatpush1.bf16.msra.mxu0 0
    %393 = vmatprep.subr.bf16.mxu0 0
    %394 = vmatpush1.bf16.msra.mxu0 0
    %395 = vmatprep.subr.bf16.mxu0 0
    %396 = vmatpush1.bf16.msra.mxu0 0
    %397 = vmatprep.subr.bf16.mxu0 0
    %398 = vmatpush1.bf16.msra.mxu0 0
    %399 = vmatprep.subr.bf16.mxu0 0
    %400 = vmatpush1.bf16.msra.mxu0 0
    %401 = vmatprep.subr.bf16.mxu0 0
    %402 = vmatpush1.bf16.msra.mxu0 0
    %403 = vmatprep.subr.bf16.mxu0 0
    %404 = vmatpush1.bf16.msra.mxu0 0
    %405 = vmatprep.subr.bf16.mxu0 0
    %406 = vmatpush1.bf16.msra.mxu0 0
    %407 = vmatprep.mubr.bf16.mxu0 0
    %408 = vmatmul.mubr.bf16.gmra.mrb[0].mxu0 %v303
    %v409 = vpop.f32.mrb[0].mxu0
    %v410 = vadd.f32 0.0, %v409
    %v411 = vpop.f32.mrb[0].mxu0
    %v412 = vpop.f32.mrb[0].mxu0
    %v413 = vadd.f32 0.0, %v412
    %v414 = vpop.f32.mrb[0].mxu0
    %415 = vmatprep.mubr.bf16.mxu0 0
    %416 = vmatmul.mubr.bf16.gmra.mrb[0].mxu0 %v304
    %v417 = vpop.f32.mrb[0].mxu0
    %v418 = vadd.f32 0.0, %v417
    %v419 = vpop.f32.mrb[0].mxu0
    %v420 = vpop.f32.mrb[0].mxu0
    %v421 = vadd.f32 0.0, %v420
    %v422 = vpop.f32.mrb[0].mxu0
    %423 = vmatprep.mubr.bf16.mxu0 0
    %424 = vmatmul.mubr.bf16.gmra.mrb[0].mxu0 %v305
    %v425 = vpop.f32.mrb[0].mxu0
    %v426 = vadd.f32 0.0, %v425
    %v427 = vpop.f32.mrb[0].mxu0
    %v428 = vpop.f32.mrb[0].mxu0
    %v429 = vadd.f32 0.0, %v428
    %v430 = vpop.f32.mrb[0].mxu0
    %431 = vmatprep.mubr.bf16.mxu0 0
    %432 = vmatmul.mubr.bf16.gmra.mrb[0].mxu0 %v306
    %v433 = vpop.f32.mrb[0].mxu0
    %v434 = vadd.f32 0.0, %v433
    %v435 = vpop.f32.mrb[0].mxu0
    %v436 = vpop.f32.mrb[0].mxu0
    %v437 = vadd.f32 0.0, %v436
    %v438 = vpop.f32.mrb[0].mxu0
    %439 = vmatprep.mubr.bf16.mxu0 0
    %440 = vmatmul.mubr.bf16.gmra.mrb[0].mxu0 %v307
    %v441 = vpop.f32.mrb[0].mxu0
    %v442 = vadd.f32 0.0, %v441
    %v443 = vpop.f32.mrb[0].mxu0
    %v444 = vpop.f32.mrb[0].mxu0
    %v445 = vadd.f32 0.0, %v444
    %v446 = vpop.f32.mrb[0].mxu0
    %447 = vmatprep.mubr.bf16.mxu0 0
    %448 = vmatmul.mubr.bf16.gmra.mrb[0].mxu0 %v308
    %v449 = vpop.f32.mrb[0].mxu0
    %v450 = vadd.f32 0.0, %v449
    %v451 = vpop.f32.mrb[0].mxu0
    %v452 = vpop.f32.mrb[0].mxu0
    %v453 = vadd.f32 0.0, %v452
    %v454 = vpop.f32.mrb[0].mxu0
    %455 = vmatprep.mubr.bf16.mxu0 0
    %456 = vmatmul.mubr.bf16.gmra.mrb[0].mxu0 %v309
    %v457 = vpop.f32.mrb[0].mxu0
    %v458 = vadd.f32 0.0, %v457
    %v459 = vpop.f32.mrb[0].mxu0
    %v460 = vpop.f32.mrb[0].mxu0
    %v461 = vadd.f32 0.0, %v460
    %v462 = vpop.f32.mrb[0].mxu0
    %463 = vmatprep.mubr.bf16.mxu0 0
    %464 = vmatmul.mubr.bf16.gmra.mrb[0].mxu0 %v310
    %v465 = vpop.f32.mrb[0].mxu0
    %v466 = vadd.f32 0.0, %v465
    %v467 = vpop.f32.mrb[0].mxu0
    %v468 = vpop.f32.mrb[0].mxu0
    %v469 = vadd.f32 0.0, %v468
    %v470 = vpop.f32.mrb[0].mxu0
    %471 = vdwg.mxu0
    %v472 = vmax.f32 %v410, 0.0
    %v473 = vmax.f32 %v413, 0.0
    %v474 = vmax.f32 %v418, 0.0
    %v475 = vmax.f32 %v421, 0.0
    %v476 = vmax.f32 %v426, 0.0
    %v477 = vmax.f32 %v429, 0.0
    %v478 = vmax.f32 %v434, 0.0
    %v479 = vmax.f32 %v437, 0.0
    %v480 = vmax.f32 %v442, 0.0
    %v481 = vmax.f32 %v445, 0.0
    %v482 = vmax.f32 %v450, 0.0
    %v483 = vmax.f32 %v453, 0.0
    %v484 = vmax.f32 %v458, 0.0
    %v485 = vmax.f32 %v461, 0.0
    %v486 = vmax.f32 %v466, 0.0
    %v487 = vmax.f32 %v469, 0.0
    %v488 = vld [vmem:[%s3 + $0x2] sm:$0x1]
    %v489 = vld [vmem:[%s3 + $0x3] sm:$0x1]
    %v490 = vld [vmem:[%s3 + $0x4] sm:$0x1]
    %v491 = vmul.f32 %v472, %v87
    %v492 = vmul.f32 %v473, %v88
    %v493 = vmul.f32 %v474, %v89
    %v494 = vmul.f32 %v475, %v90
    %v495 = vmul.f32 %v476, %v91
    %v496 = vmul.f32 %v477, %v92
    %v497 = vmul.f32 %v478, %v93
    %v498 = vmul.f32 %v479, %v94
    %v499 = vmul.f32 %v480, %v95
    %v500 = vmul.f32 %v481, %v96
    %v501 = vmul.f32 %v482, %v97
    %v502 = vmul.f32 %v483, %v98
    %v503 = vmul.f32 %v484, %v99
    %v504 = vmul.f32 %v485, %v100
    %v505 = vmul.f32 %v486, %v101
    %v506 = vmul.f32 %v487, %v102
    %v507 = vadd.f32 %v491, %v492
    %v508 = vadd.f32 %v507, %v493
    %v509 = vadd.f32 %v508, %v494
    %v510 = vadd.f32 %v509, %v495
    %v511 = vadd.f32 %v510, %v496
    %v512 = vadd.f32 %v511, %v497
    %v513 = vadd.f32 %v512, %v498
    %v514 = vadd.f32 %v513, %v499
    %v515 = vadd.f32 %v514, %v500
    %v516 = vadd.f32 %v515, %v501
    %v517 = vadd.f32 %v516, %v502
    %v518 = vadd.f32 %v517, %v503
    %v519 = vadd.f32 %v518, %v504
    %v520 = vadd.f32 %v519, %v505
    %v521 = vadd.f32 %v520, %v506
    %v522 = vrot.slane %v521, 4
    %v523 = vadd.f32 %v521, %v522
    %v524 = vrot.slane %v523, 2
    %v525 = vadd.f32 %v523, %v524
    %v526 = vrot.slane %v525, 1
    %v527 = vadd.f32 %v525, %v526
    %v528 = vmul.f32 %v527, 0.0625
    %v529 = vsub.f32 %v472, %v528
    %v530 = vsub.f32 %v473, %v528
    %v531 = vsub.f32 %v474, %v528
    %v532 = vsub.f32 %v475, %v528
    %v533 = vsub.f32 %v476, %v528
    %v534 = vsub.f32 %v477, %v528
    %v535 = vsub.f32 %v478, %v528
    %v536 = vsub.f32 %v479, %v528
    %v537 = vsub.f32 %v480, %v528
    %v538 = vsub.f32 %v481, %v528
    %v539 = vsub.f32 %v482, %v528
    %v540 = vsub.f32 %v483, %v528
    %v541 = vsub.f32 %v484, %v528
    %v542 = vsub.f32 %v485, %v528
    %v543 = vsub.f32 %v486, %v528
    %v544 = vsub.f32 %v487, %v528
    %v545 = vmul.f32 %v529, %v87
    %v546 = vmul.f32 %v530, %v88
    %v547 = vmul.f32 %v531, %v89
    %v548 = vmul.f32 %v532, %v90
    %v549 = vmul.f32 %v533, %v91
    %v550 = vmul.f32 %v534, %v92
    %v551 = vmul.f32 %v535, %v93
    %v552 = vmul.f32 %v536, %v94
    %v553 = vmul.f32 %v537, %v95
    %v554 = vmul.f32 %v538, %v96
    %v555 = vmul.f32 %v539, %v97
    %v556 = vmul.f32 %v540, %v98
    %v557 = vmul.f32 %v541, %v99
    %v558 = vmul.f32 %v542, %v100
    %v559 = vmul.f32 %v543, %v101
    %v560 = vmul.f32 %v544, %v102
    %v561 = vmul.f32 %v545, %v545
    %v562 = vmul.f32 %v546, %v546
    %v563 = vmul.f32 %v547, %v547
    %v564 = vmul.f32 %v548, %v548
    %v565 = vmul.f32 %v549, %v549
    %v566 = vmul.f32 %v550, %v550
    %v567 = vmul.f32 %v551, %v551
    %v568 = vmul.f32 %v552, %v552
    %v569 = vmul.f32 %v553, %v553
    %v570 = vmul.f32 %v554, %v554
    %v571 = vmul.f32 %v555, %v555
    %v572 = vmul.f32 %v556, %v556
    %v573 = vmul.f32 %v557, %v557
    %v574 = vmul.f32 %v558, %v558
    %v575 = vmul.f32 %v559, %v559
    %v576 = vmul.f32 %v560, %v560
    %v577 = vadd.f32 %v561, %v562
    %v578 = vadd.f32 %v577, %v563
    %v579 = vadd.f32 %v578, %v564
    %v580 = vadd.f32 %v579, %v565
    %v581 = vadd.f32 %v580, %v566
    %v582 = vadd.f32 %v581, %v567
    %v583 = vadd.f32 %v582, %v568
    %v584 = vadd.f32 %v583, %v569
    %v585 = vadd.f32 %v584, %v570
    %v586 = vadd.f32 %v585, %v571
    %v587 = vadd.f32 %v586, %v572
    %v588 = vadd.f32 %v587, %v573
    %v589 = vadd.f32 %v588, %v574
    %v590 = vadd.f32 %v589, %v575
    %v591 = vadd.f32 %v590, %v576
    %v592 = vrot.slane %v591, 4
    %v593 = vadd.f32 %v591, %v592
    %v594 = vrot.slane %v593, 2
    %v595 = vadd.f32 %v593, %v594
    %v596 = vrot.slane %v595, 1
    %v597 = vadd.f32 %v595, %v596
    %v598 = vmul.f32 %v597, 0.0625
    %v599 = vlaneseq
    %v600 = vshrl.u32 %v599, 7
    %v601 = vsub.s32 0, %v600
    %v602 = vrot.slane %v488, %v601
    %v603 = vmul.f32 %v602, %v529
    %v604 = vmul.f32 %v602, %v530
    %v605 = vmul.f32 %v602, %v531
    %v606 = vmul.f32 %v602, %v532
    %v607 = vmul.f32 %v602, %v533
    %v608 = vmul.f32 %v602, %v534
    %v609 = vmul.f32 %v602, %v535
    %v610 = vmul.f32 %v602, %v536
    %v611 = vmul.f32 %v602, %v537
    %v612 = vmul.f32 %v602, %v538
    %v613 = vmul.f32 %v602, %v539
    %v614 = vmul.f32 %v602, %v540
    %v615 = vmul.f32 %v602, %v541
    %v616 = vmul.f32 %v602, %v542
    %v617 = vmul.f32 %v602, %v543
    %v618 = vmul.f32 %v602, %v544
    %v619 = vadd.f32 %v598, 1e-05
    %v620 = vrsqrt.pop %v619
    %v621 = vmul.f32 %v603, %v620
    %v622 = vmul.f32 %v604, %v620
    %v623 = vmul.f32 %v605, %v620
    %v624 = vmul.f32 %v606, %v620
    %v625 = vmul.f32 %v607, %v620
    %v626 = vmul.f32 %v608, %v620
    %v627 = vmul.f32 %v609, %v620
    %v628 = vmul.f32 %v610, %v620
    %v629 = vmul.f32 %v611, %v620
    %v630 = vmul.f32 %v612, %v620
    %v631 = vmul.f32 %v613, %v620
    %v632 = vmul.f32 %v614, %v620
    %v633 = vmul.f32 %v615, %v620
    %v634 = vmul.f32 %v616, %v620
    %v635 = vmul.f32 %v617, %v620
    %v636 = vmul.f32 %v618, %v620
    %v637 = vlaneseq
    %v638 = vshrl.u32 %v637, 7
    %v639 = vsub.s32 0, %v638
    %v640 = vrot.slane %v489, %v639
    %v641 = vadd.f32 %v621, %v640
    %v642 = vadd.f32 %v622, %v640
    %v643 = vadd.f32 %v623, %v640
    %v644 = vadd.f32 %v624, %v640
    %v645 = vadd.f32 %v625, %v640
    %v646 = vadd.f32 %v626, %v640
    %v647 = vadd.f32 %v627, %v640
    %v648 = vadd.f32 %v628, %v640
    %v649 = vadd.f32 %v629, %v640
    %v650 = vadd.f32 %v630, %v640
    %v651 = vadd.f32 %v631, %v640
    %v652 = vadd.f32 %v632, %v640
    %v653 = vadd.f32 %v633, %v640
    %v654 = vadd.f32 %v634, %v640
    %v655 = vadd.f32 %v635, %v640
    %v656 = vadd.f32 %v636, %v640
    %v657 = vpack.c.bf16 %v642, %v641
    %v658 = vpack.c.bf16 %v644, %v643
    %v659 = vpack.c.bf16 %v646, %v645
    %v660 = vpack.c.bf16 %v648, %v647
    %v661 = vpack.c.bf16 %v650, %v649
    %v662 = vpack.c.bf16 %v652, %v651
    %v663 = vpack.c.bf16 %v654, %v653
    %v664 = vpack.c.bf16 %v656, %v655
    %v665 = vld [vmem:[%s5] sm:$0xf]
    %v666 = vld [vmem:[%s5 + $0x4] sm:$0xf]
    %v667 = vld [vmem:[%s5 + $0x8] sm:$0xf]
    %v668 = vld [vmem:[%s5 + $0xc] sm:$0xf]
    %v669 = vld [vmem:[%s5 + $0x10] sm:$0xf]
    %v670 = vld [vmem:[%s5 + $0x14] sm:$0xf]
    %v671 = vld [vmem:[%s5 + $0x18] sm:$0xf]
    %v672 = vld [vmem:[%s5 + $0x1c] sm:$0xf]
    %v673 = vld [vmem:[%s5 + $0x20] sm:$0xf]
    %v674 = vld [vmem:[%s5 + $0x24] sm:$0xf]
    %v675 = vld [vmem:[%s5 + $0x28] sm:$0xf]
    %v676 = vld [vmem:[%s5 + $0x2c] sm:$0xf]
    %v677 = vld [vmem:[%s5 + $0x30] sm:$0xf]
    %v678 = vld [vmem:[%s5 + $0x34] sm:$0xf]
    %v679 = vld [vmem:[%s5 + $0x38] sm:$0xf]
    %v680 = vld [vmem:[%s5 + $0x3c] sm:$0xf]
    %v697 = vunpack.c.l.b16 %v665
    %v698 = vunpack.c.l.b16 %v666
    %v699 = vunpack.c.l.b16 %v667
    %v700 = vunpack.c.l.b16 %v668
    %v701 = vunpack.c.l.b16 %v669
    %v702 = vunpack.c.l.b16 %v670
    %v703 = vunpack.c.l.b16 %v671
    %v704 = vunpack.c.l.b16 %v672
    %v705 = vunpack.c.l.b16 %v673
    %v706 = vunpack.c.l.b16 %v674
    %v707 = vunpack.c.l.b16 %v675
    %v708 = vunpack.c.l.b16 %v676
    %v709 = vunpack.c.l.b16 %v677
    %v710 = vunpack.c.l.b16 %v678
    %v711 = vunpack.c.l.b16 %v679
    %v712 = vunpack.c.l.b16 %v680
    %v713 = vpack.c.b16 %v698, %v697
    %v714 = vpack.c.b16 %v700, %v699
    %v715 = vpack.c.b16 %v702, %v701
    %v716 = vpack.c.b16 %v704, %v703
    %v717 = vpack.c.b16 %v706, %v705
    %v718 = vpack.c.b16 %v708, %v707
    %v719 = vpack.c.b16 %v710, %v709
    %v720 = vpack.c.b16 %v712, %v711
    %729 = vmatprep.subr.bf16.mxu0 0
    %730 = vmatpush1.bf16.msra.mxu0 %v713
    %731 = vmatprep.subr.bf16.mxu0 0
    %732 = vmatpush1.bf16.msra.mxu0 %v714
    %733 = vmatprep.subr.bf16.mxu0 0
    %734 = vmatpush1.bf16.msra.mxu0 %v715
    %735 = vmatprep.subr.bf16.mxu0 0
    %736 = vmatpush1.bf16.msra.mxu0 %v716
    %737 = vmatprep.subr.bf16.mxu0 0
    %738 = vmatpush1.bf16.msra.mxu0 %v717
    %739 = vmatprep.subr.bf16.mxu0 0
    %740 = vmatpush1.bf16.msra.mxu0 %v718
    %741 = vmatprep.subr.bf16.mxu0 0
    %742 = vmatpush1.bf16.msra.mxu0 %v719
    %743 = vmatprep.subr.bf16.mxu0 0
    %744 = vmatpush1.bf16.msra.mxu0 %v720
    %745 = vmatprep.subr.bf16.mxu0 0
    %746 = vmatpush1.bf16.msra.mxu0 0
    %747 = vmatprep.subr.bf16.mxu0 0
    %748 = vmatpush1.bf16.msra.mxu0 0
    %749 = vmatprep.subr.bf16.mxu0 0
    %750 = vmatpush1.bf16.msra.mxu0 0
    %751 = vmatprep.subr.bf16.mxu0 0
    %752 = vmatpush1.bf16.msra.mxu0 0
    %753 = vmatprep.subr.bf16.mxu0 0
    %754 = vmatpush1.bf16.msra.mxu0 0
    %755 = vmatprep.subr.bf16.mxu0 0
    %756 = vmatpush1.bf16.msra.mxu0 0
    %757 = vmatprep.subr.bf16.mxu0 0
    %758 = vmatpush1.bf16.msra.mxu0 0
    %759 = vmatprep.subr.bf16.mxu0 0
    %760 = vmatpush1.bf16.msra.mxu0 0
    %761 = vmatprep.mubr.bf16.mxu0 0
    %762 = vmatmul.mubr.bf16.gmra.mrb[0].mxu0 %v657
    %v763 = vpop.f32.mrb[0].mxu0
    %v764 = vadd.f32 0.0, %v763
    %v765 = vpop.f32.mrb[0].mxu0
    %v766 = vpop.f32.mrb[0].mxu0
    %v767 = vadd.f32 0.0, %v766
    %v768 = vpop.f32.mrb[0].mxu0
    %769 = vmatprep.mubr.bf16.mxu0 0
    %770 = vmatmul.mubr.bf16.gmra.mrb[0].mxu0 %v658
    %v771 = vpop.f32.mrb[0].mxu0
    %v772 = vadd.f32 0.0, %v771
    %v773 = vpop.f32.mrb[0].mxu0
    %v774 = vpop.f32.mrb[0].mxu0
    %v775 = vadd.f32 0.0, %v774
    %v776 = vpop.f32.mrb[0].mxu0
    %777 = vmatprep.mubr.bf16.mxu0 0
    %778 = vmatmul.mubr.bf16.gmra.mrb[0].mxu0 %v659
    %v779 = vpop.f32.mrb[0].mxu0
    %v780 = vadd.f32 0.0, %v779
    %v781 = vpop.f32.mrb[0].mxu0
    %v782 = vpop.f32.mrb[0].mxu0
    %v783 = vadd.f32 0.0, %v782
    %v784 = vpop.f32.mrb[0].mxu0
    %785 = vmatprep.mubr.bf16.mxu0 0
    %786 = vmatmul.mubr.bf16.gmra.mrb[0].mxu0 %v660
    %v787 = vpop.f32.mrb[0].mxu0
    %v788 = vadd.f32 0.0, %v787
    %v789 = vpop.f32.mrb[0].mxu0
    %v790 = vpop.f32.mrb[0].mxu0
    %v791 = vadd.f32 0.0, %v790
    %v792 = vpop.f32.mrb[0].mxu0
    %793 = vmatprep.mubr.bf16.mxu0 0
    %794 = vmatmul.mubr.bf16.gmra.mrb[0].mxu0 %v661
    %v795 = vpop.f32.mrb[0].mxu0
    %v796 = vadd.f32 0.0, %v795
    %v797 = vpop.f32.mrb[0].mxu0
    %v798 = vpop.f32.mrb[0].mxu0
    %v799 = vadd.f32 0.0, %v798
    %v800 = vpop.f32.mrb[0].mxu0
    %801 = vmatprep.mubr.bf16.mxu0 0
    %802 = vmatmul.mubr.bf16.gmra.mrb[0].mxu0 %v662
    %v803 = vpop.f32.mrb[0].mxu0
    %v804 = vadd.f32 0.0, %v803
    %v805 = vpop.f32.mrb[0].mxu0
    %v806 = vpop.f32.mrb[0].mxu0
    %v807 = vadd.f32 0.0, %v806
    %v808 = vpop.f32.mrb[0].mxu0
    %809 = vmatprep.mubr.bf16.mxu0 0
    %810 = vmatmul.mubr.bf16.gmra.mrb[0].mxu0 %v663
    %v811 = vpop.f32.mrb[0].mxu0
    %v812 = vadd.f32 0.0, %v811
    %v813 = vpop.f32.mrb[0].mxu0
    %v814 = vpop.f32.mrb[0].mxu0
    %v815 = vadd.f32 0.0, %v814
    %v816 = vpop.f32.mrb[0].mxu0
    %817 = vmatprep.mubr.bf16.mxu0 0
    %818 = vmatmul.mubr.bf16.gmra.mrb[0].mxu0 %v664
    %v819 = vpop.f32.mrb[0].mxu0
    %v820 = vadd.f32 0.0, %v819
    %v821 = vpop.f32.mrb[0].mxu0
    %v822 = vpop.f32.mrb[0].mxu0
    %v823 = vadd.f32 0.0, %v822
    %v824 = vpop.f32.mrb[0].mxu0
    %825 = vdwg.mxu0
    %v826 = vlaneseq
    %v827 = vshrl.u32 %v826, 7
    %v828 = vsub.s32 0, %v827
    %v829 = vrot.slane %v490, %v828
    %830 = vmatprep.subr.mxu0 0.0
    %831 = vmatpush1.msra.mxu0 %v764
    %832 = vmatprep.subr.mxu0 0.0
    %833 = vmatpush1.msra.mxu0 %v767
    %834 = vmatprep.subr.mxu0 0.0
    %835 = vmatpush1.msra.mxu0 %v772
    %836 = vmatprep.subr.mxu0 0.0
    %837 = vmatpush1.msra.mxu0 %v775
    %838 = vmatprep.subr.mxu0 0.0
    %839 = vmatpush1.msra.mxu0 %v780
    %840 = vmatprep.subr.mxu0 0.0
    %841 = vmatpush1.msra.mxu0 %v783
    %842 = vmatprep.subr.mxu0 0.0
    %843 = vmatpush1.msra.mxu0 %v788
    %844 = vmatprep.subr.mxu0 0.0
    %845 = vmatpush1.msra.mxu0 %v791
    %846 = vmatprep.subr.mxu0 0.0
    %847 = vmatpush1.msra.mxu0 %v796
    %848 = vmatprep.subr.mxu0 0.0
    %849 = vmatpush1.msra.mxu0 %v799
    %850 = vmatprep.subr.mxu0 0.0
    %851 = vmatpush1.msra.mxu0 %v804
    %852 = vmatprep.subr.mxu0 0.0
    %853 = vmatpush1.msra.mxu0 %v807
    %854 = vmatprep.subr.mxu0 0.0
    %855 = vmatpush1.msra.mxu0 %v812
    %856 = vmatprep.subr.mxu0 0.0
    %857 = vmatpush1.msra.mxu0 %v815
    %858 = vmatprep.subr.mxu0 0.0
    %859 = vmatpush1.msra.mxu0 %v820
    %860 = vmatprep.subr.mxu0 0.0
    %861 = vmatpush1.msra.mxu0 %v823
    %862 = vmatprep.subr.mxu0 0.0
    %863 = vmatpush1.msra.mxu0 0.0
    %864 = vmatprep.subr.mxu0 0.0
    %865 = vmatpush1.msra.mxu0 0.0
    %866 = vmatprep.subr.mxu0 0.0
    %867 = vmatpush1.msra.mxu0 0.0
    %868 = vmatprep.subr.mxu0 0.0
    %869 = vmatpush1.msra.mxu0 0.0
    %870 = vmatprep.subr.mxu0 0.0
    %871 = vmatpush1.msra.mxu0 0.0
    %872 = vmatprep.subr.mxu0 0.0
    %873 = vmatpush1.msra.mxu0 0.0
    %874 = vmatprep.subr.mxu0 0.0
    %875 = vmatpush1.msra.mxu0 0.0
    %876 = vmatprep.subr.mxu0 0.0
    %877 = vmatpush1.msra.mxu0 0.0
    %878 = vmatprep.subr.mxu0 0.0
    %879 = vmatpush1.msra.mxu0 0.0
    %880 = vmatprep.subr.mxu0 0.0
    %881 = vmatpush1.msra.mxu0 0.0
    %882 = vmatprep.subr.mxu0 0.0
    %883 = vmatpush1.msra.mxu0 0.0
    %884 = vmatprep.subr.mxu0 0.0
    %885 = vmatpush1.msra.mxu0 0.0
    %886 = vmatprep.subr.mxu0 0.0
    %887 = vmatpush1.msra.mxu0 0.0
    %888 = vmatprep.subr.mxu0 0.0
    %889 = vmatpush1.msra.mxu0 0.0
    %890 = vmatprep.subr.mxu0 0.0
    %891 = vmatpush1.msra.mxu0 0.0
    %892 = vmatprep.subr.mxu0 0.0
    %893 = vmatpush1.msra.mxu0 0.0
    %894 = vmatprep.mubr.f32.mxu0 0.0
    %895 = vmatmul.mubr.f32.gmra.mrb[0].mxu0 %v103
    %v896 = vpop.f32.mrb[0].mxu0
    %v897 = vadd.f32 %v829, %v896
    %v898 = vpop.f32.mrb[0].mxu0
    %899 = vmatprep.mubr.f32.mxu0 0.0
    %900 = vmatmul.mubr.f32.gmra.mrb[0].mxu0 %v104
    %v901 = vpop.f32.mrb[0].mxu0
    %v902 = vadd.f32 %v829, %v901
    %v903 = vpop.f32.mrb[0].mxu0
    %904 = vmatprep.mubr.f32.mxu0 0.0
    %905 = vmatmul.mubr.f32.gmra.mrb[0].mxu0 %v105
    %v906 = vpop.f32.mrb[0].mxu0
    %v907 = vadd.f32 %v829, %v906
    %v908 = vpop.f32.mrb[0].mxu0
    %909 = vmatprep.mubr.f32.mxu0 0.0
    %910 = vmatmul.mubr.f32.gmra.mrb[0].mxu0 %v106
    %v911 = vpop.f32.mrb[0].mxu0
    %v912 = vadd.f32 %v829, %v911
    %v913 = vpop.f32.mrb[0].mxu0
    %914 = vmatprep.mubr.f32.mxu0 0.0
    %915 = vmatmul.mubr.f32.gmra.mrb[0].mxu0 %v107
    %v916 = vpop.f32.mrb[0].mxu0
    %v917 = vadd.f32 %v829, %v916
    %v918 = vpop.f32.mrb[0].mxu0
    %919 = vmatprep.mubr.f32.mxu0 0.0
    %920 = vmatmul.mubr.f32.gmra.mrb[0].mxu0 %v108
    %v921 = vpop.f32.mrb[0].mxu0
    %v922 = vadd.f32 %v829, %v921
    %v923 = vpop.f32.mrb[0].mxu0
    %924 = vmatprep.mubr.f32.mxu0 0.0
    %925 = vmatmul.mubr.f32.gmra.mrb[0].mxu0 %v109
    %v926 = vpop.f32.mrb[0].mxu0
    %v927 = vadd.f32 %v829, %v926
    %v928 = vpop.f32.mrb[0].mxu0
    %929 = vmatprep.mubr.f32.mxu0 0.0
    %930 = vmatmul.mubr.f32.gmra.mrb[0].mxu0 %v110
    %v931 = vpop.f32.mrb[0].mxu0
    %v932 = vadd.f32 %v829, %v931
    %v933 = vpop.f32.mrb[0].mxu0
    %934 = vmatprep.mubr.f32.mxu0 0.0
    %935 = vmatmul.mubr.f32.gmra.mrb[0].mxu0 %v111
    %v936 = vpop.f32.mrb[0].mxu0
    %v937 = vadd.f32 %v829, %v936
    %v938 = vpop.f32.mrb[0].mxu0
    %939 = vmatprep.mubr.f32.mxu0 0.0
    %940 = vmatmul.mubr.f32.gmra.mrb[0].mxu0 %v112
    %v941 = vpop.f32.mrb[0].mxu0
    %v942 = vadd.f32 %v829, %v941
    %v943 = vpop.f32.mrb[0].mxu0
    %944 = vmatprep.mubr.f32.mxu0 0.0
    %945 = vmatmul.mubr.f32.gmra.mrb[0].mxu0 %v113
    %v946 = vpop.f32.mrb[0].mxu0
    %v947 = vadd.f32 %v829, %v946
    %v948 = vpop.f32.mrb[0].mxu0
    %949 = vmatprep.mubr.f32.mxu0 0.0
    %950 = vmatmul.mubr.f32.gmra.mrb[0].mxu0 %v114
    %v951 = vpop.f32.mrb[0].mxu0
    %v952 = vadd.f32 %v829, %v951
    %v953 = vpop.f32.mrb[0].mxu0
    %954 = vmatprep.mubr.f32.mxu0 0.0
    %955 = vmatmul.mubr.f32.gmra.mrb[0].mxu0 %v115
    %v956 = vpop.f32.mrb[0].mxu0
    %v957 = vadd.f32 %v829, %v956
    %v958 = vpop.f32.mrb[0].mxu0
    %959 = vmatprep.mubr.f32.mxu0 0.0
    %960 = vmatmul.mubr.f32.gmra.mrb[0].mxu0 %v116
    %v961 = vpop.f32.mrb[0].mxu0
    %v962 = vadd.f32 %v829, %v961
    %v963 = vpop.f32.mrb[0].mxu0
    %964 = vmatprep.mubr.f32.mxu0 0.0
    %965 = vmatmul.mubr.f32.gmra.mrb[0].mxu0 %v117
    %v966 = vpop.f32.mrb[0].mxu0
    %v967 = vadd.f32 %v829, %v966
    %v968 = vpop.f32.mrb[0].mxu0
    %969 = vmatprep.mubr.f32.mxu0 0.0
    %970 = vmatmul.mubr.f32.gmra.mrb[0].mxu0 %v118
    %v971 = vpop.f32.mrb[0].mxu0
    %v972 = vadd.f32 %v829, %v971
    %v973 = vpop.f32.mrb[0].mxu0
    %974 = vdwg.mxu0
    %v975 = vmax.f32 %v897, 0.0
    %v976 = vmax.f32 %v902, 0.0
    %v977 = vmax.f32 %v907, 0.0
    %v978 = vmax.f32 %v912, 0.0
    %v979 = vmax.f32 %v917, 0.0
    %v980 = vmax.f32 %v922, 0.0
    %v981 = vmax.f32 %v927, 0.0
    %v982 = vmax.f32 %v932, 0.0
    %v983 = vmax.f32 %v937, 0.0
    %v984 = vmax.f32 %v942, 0.0
    %v985 = vmax.f32 %v947, 0.0
    %v986 = vmax.f32 %v952, 0.0
    %v987 = vmax.f32 %v957, 0.0
    %v988 = vmax.f32 %v962, 0.0
    %v989 = vmax.f32 %v967, 0.0
    %v990 = vmax.f32 %v972, 0.0
    %v991 = vld [vmem:[%s3 + $0x5] sm:$0x1]
    %v992 = vld [vmem:[%s3 + $0x6] sm:$0x1]
    %v993 = vld [vmem:[%s3 + $0x7] sm:$0x1]
    %v994 = vmul.f32 %v975, %v87
    %v995 = vmul.f32 %v976, %v88
    %v996 = vmul.f32 %v977, %v89
    %v997 = vmul.f32 %v978, %v90
    %v998 = vmul.f32 %v979, %v91
    %v999 = vmul.f32 %v980, %v92
    %v1000 = vmul.f32 %v981, %v93
    %v1001 = vmul.f32 %v982, %v94
    %v1002 = vmul.f32 %v983, %v95
    %v1003 = vmul.f32 %v984, %v96
    %v1004 = vmul.f32 %v985, %v97
    %v1005 = vmul.f32 %v986, %v98
    %v1006 = vmul.f32 %v987, %v99
    %v1007 = vmul.f32 %v988, %v100
    %v1008 = vmul.f32 %v989, %v101
    %v1009 = vmul.f32 %v990, %v102
    %v1010 = vadd.f32 %v994, %v995
    %v1011 = vadd.f32 %v1010, %v996
    %v1012 = vadd.f32 %v1011, %v997
    %v1013 = vadd.f32 %v1012, %v998
    %v1014 = vadd.f32 %v1013, %v999
    %v1015 = vadd.f32 %v1014, %v1000
    %v1016 = vadd.f32 %v1015, %v1001
    %v1017 = vadd.f32 %v1016, %v1002
    %v1018 = vadd.f32 %v1017, %v1003
    %v1019 = vadd.f32 %v1018, %v1004
    %v1020 = vadd.f32 %v1019, %v1005
    %v1021 = vadd.f32 %v1020, %v1006
    %v1022 = vadd.f32 %v1021, %v1007
    %v1023 = vadd.f32 %v1022, %v1008
    %v1024 = vadd.f32 %v1023, %v1009
    %v1025 = vrot.slane %v1024, 4
    %v1026 = vadd.f32 %v1024, %v1025
    %v1027 = vrot.slane %v1026, 2
    %v1028 = vadd.f32 %v1026, %v1027
    %v1029 = vrot.slane %v1028, 1
    %v1030 = vadd.f32 %v1028, %v1029
    %v1031 = vmul.f32 %v1030, 0.0625
    %v1032 = vsub.f32 %v975, %v1031
    %v1033 = vsub.f32 %v976, %v1031
    %v1034 = vsub.f32 %v977, %v1031
    %v1035 = vsub.f32 %v978, %v1031
    %v1036 = vsub.f32 %v979, %v1031
    %v1037 = vsub.f32 %v980, %v1031
    %v1038 = vsub.f32 %v981, %v1031
    %v1039 = vsub.f32 %v982, %v1031
    %v1040 = vsub.f32 %v983, %v1031
    %v1041 = vsub.f32 %v984, %v1031
    %v1042 = vsub.f32 %v985, %v1031
    %v1043 = vsub.f32 %v986, %v1031
    %v1044 = vsub.f32 %v987, %v1031
    %v1045 = vsub.f32 %v988, %v1031
    %v1046 = vsub.f32 %v989, %v1031
    %v1047 = vsub.f32 %v990, %v1031
    %v1048 = vmul.f32 %v1032, %v87
    %v1049 = vmul.f32 %v1033, %v88
    %v1050 = vmul.f32 %v1034, %v89
    %v1051 = vmul.f32 %v1035, %v90
    %v1052 = vmul.f32 %v1036, %v91
    %v1053 = vmul.f32 %v1037, %v92
    %v1054 = vmul.f32 %v1038, %v93
    %v1055 = vmul.f32 %v1039, %v94
    %v1056 = vmul.f32 %v1040, %v95
    %v1057 = vmul.f32 %v1041, %v96
    %v1058 = vmul.f32 %v1042, %v97
    %v1059 = vmul.f32 %v1043, %v98
    %v1060 = vmul.f32 %v1044, %v99
    %v1061 = vmul.f32 %v1045, %v100
    %v1062 = vmul.f32 %v1046, %v101
    %v1063 = vmul.f32 %v1047, %v102
    %v1064 = vmul.f32 %v1048, %v1048
    %v1065 = vmul.f32 %v1049, %v1049
    %v1066 = vmul.f32 %v1050, %v1050
    %v1067 = vmul.f32 %v1051, %v1051
    %v1068 = vmul.f32 %v1052, %v1052
    %v1069 = vmul.f32 %v1053, %v1053
    %v1070 = vmul.f32 %v1054, %v1054
    %v1071 = vmul.f32 %v1055, %v1055
    %v1072 = vmul.f32 %v1056, %v1056
    %v1073 = vmul.f32 %v1057, %v1057
    %v1074 = vmul.f32 %v1058, %v1058
    %v1075 = vmul.f32 %v1059, %v1059
    %v1076 = vmul.f32 %v1060, %v1060
    %v1077 = vmul.f32 %v1061, %v1061
    %v1078 = vmul.f32 %v1062, %v1062
    %v1079 = vmul.f32 %v1063, %v1063
    %v1080 = vadd.f32 %v1064, %v1065
    %v1081 = vadd.f32 %v1080, %v1066
    %v1082 = vadd.f32 %v1081, %v1067
    %v1083 = vadd.f32 %v1082, %v1068
    %v1084 = vadd.f32 %v1083, %v1069
    %v1085 = vadd.f32 %v1084, %v1070
    %v1086 = vadd.f32 %v1085, %v1071
    %v1087 = vadd.f32 %v1086, %v1072
    %v1088 = vadd.f32 %v1087, %v1073
    %v1089 = vadd.f32 %v1088, %v1074
    %v1090 = vadd.f32 %v1089, %v1075
    %v1091 = vadd.f32 %v1090, %v1076
    %v1092 = vadd.f32 %v1091, %v1077
    %v1093 = vadd.f32 %v1092, %v1078
    %v1094 = vadd.f32 %v1093, %v1079
    %v1095 = vrot.slane %v1094, 4
    %v1096 = vadd.f32 %v1094, %v1095
    %v1097 = vrot.slane %v1096, 2
    %v1098 = vadd.f32 %v1096, %v1097
    %v1099 = vrot.slane %v1098, 1
    %v1100 = vadd.f32 %v1098, %v1099
    %v1101 = vmul.f32 %v1100, 0.0625
    %v1102 = vlaneseq
    %v1103 = vshrl.u32 %v1102, 7
    %v1104 = vsub.s32 0, %v1103
    %v1105 = vrot.slane %v991, %v1104
    %v1106 = vmul.f32 %v1105, %v1032
    %v1107 = vmul.f32 %v1105, %v1033
    %v1108 = vmul.f32 %v1105, %v1034
    %v1109 = vmul.f32 %v1105, %v1035
    %v1110 = vmul.f32 %v1105, %v1036
    %v1111 = vmul.f32 %v1105, %v1037
    %v1112 = vmul.f32 %v1105, %v1038
    %v1113 = vmul.f32 %v1105, %v1039
    %v1114 = vmul.f32 %v1105, %v1040
    %v1115 = vmul.f32 %v1105, %v1041
    %v1116 = vmul.f32 %v1105, %v1042
    %v1117 = vmul.f32 %v1105, %v1043
    %v1118 = vmul.f32 %v1105, %v1044
    %v1119 = vmul.f32 %v1105, %v1045
    %v1120 = vmul.f32 %v1105, %v1046
    %v1121 = vmul.f32 %v1105, %v1047
    %v1122 = vadd.f32 %v1101, 1e-05
    %v1123 = vrsqrt.pop %v1122
    %v1124 = vmul.f32 %v1106, %v1123
    %v1125 = vmul.f32 %v1107, %v1123
    %v1126 = vmul.f32 %v1108, %v1123
    %v1127 = vmul.f32 %v1109, %v1123
    %v1128 = vmul.f32 %v1110, %v1123
    %v1129 = vmul.f32 %v1111, %v1123
    %v1130 = vmul.f32 %v1112, %v1123
    %v1131 = vmul.f32 %v1113, %v1123
    %v1132 = vmul.f32 %v1114, %v1123
    %v1133 = vmul.f32 %v1115, %v1123
    %v1134 = vmul.f32 %v1116, %v1123
    %v1135 = vmul.f32 %v1117, %v1123
    %v1136 = vmul.f32 %v1118, %v1123
    %v1137 = vmul.f32 %v1119, %v1123
    %v1138 = vmul.f32 %v1120, %v1123
    %v1139 = vmul.f32 %v1121, %v1123
    %v1140 = vlaneseq
    %v1141 = vshrl.u32 %v1140, 7
    %v1142 = vsub.s32 0, %v1141
    %v1143 = vrot.slane %v992, %v1142
    %v1144 = vadd.f32 %v1124, %v1143
    %v1145 = vadd.f32 %v1125, %v1143
    %v1146 = vadd.f32 %v1126, %v1143
    %v1147 = vadd.f32 %v1127, %v1143
    %v1148 = vadd.f32 %v1128, %v1143
    %v1149 = vadd.f32 %v1129, %v1143
    %v1150 = vadd.f32 %v1130, %v1143
    %v1151 = vadd.f32 %v1131, %v1143
    %v1152 = vadd.f32 %v1132, %v1143
    %v1153 = vadd.f32 %v1133, %v1143
    %v1154 = vadd.f32 %v1134, %v1143
    %v1155 = vadd.f32 %v1135, %v1143
    %v1156 = vadd.f32 %v1136, %v1143
    %v1157 = vadd.f32 %v1137, %v1143
    %v1158 = vadd.f32 %v1138, %v1143
    %v1159 = vadd.f32 %v1139, %v1143
    %v1160 = vpack.c.bf16 %v1145, %v1144
    %v1161 = vpack.c.bf16 %v1147, %v1146
    %v1162 = vpack.c.bf16 %v1149, %v1148
    %v1163 = vpack.c.bf16 %v1151, %v1150
    %v1164 = vpack.c.bf16 %v1153, %v1152
    %v1165 = vpack.c.bf16 %v1155, %v1154
    %v1166 = vpack.c.bf16 %v1157, %v1156
    %v1167 = vpack.c.bf16 %v1159, %v1158
    %s1168 = scalar_lea.vmem %s5, 64
    %v1169 = vld [vmem:[%s1168] sm:$0xf]
    %v1170 = vld [vmem:[%s1168 + $0x4] sm:$0xf]
    %v1171 = vld [vmem:[%s1168 + $0x8] sm:$0xf]
    %v1172 = vld [vmem:[%s1168 + $0xc] sm:$0xf]
    %v1173 = vld [vmem:[%s1168 + $0x10] sm:$0xf]
    %v1174 = vld [vmem:[%s1168 + $0x14] sm:$0xf]
    %v1175 = vld [vmem:[%s1168 + $0x18] sm:$0xf]
    %v1176 = vld [vmem:[%s1168 + $0x1c] sm:$0xf]
    %v1177 = vld [vmem:[%s1168 + $0x20] sm:$0xf]
    %v1178 = vld [vmem:[%s1168 + $0x24] sm:$0xf]
    %v1179 = vld [vmem:[%s1168 + $0x28] sm:$0xf]
    %v1180 = vld [vmem:[%s1168 + $0x2c] sm:$0xf]
    %v1181 = vld [vmem:[%s1168 + $0x30] sm:$0xf]
    %v1182 = vld [vmem:[%s1168 + $0x34] sm:$0xf]
    %v1183 = vld [vmem:[%s1168 + $0x38] sm:$0xf]
    %v1184 = vld [vmem:[%s1168 + $0x3c] sm:$0xf]
    %v1201 = vunpack.c.l.b16 %v1169
    %v1202 = vunpack.c.l.b16 %v1170
    %v1203 = vunpack.c.l.b16 %v1171
    %v1204 = vunpack.c.l.b16 %v1172
    %v1205 = vunpack.c.l.b16 %v1173
    %v1206 = vunpack.c.l.b16 %v1174
    %v1207 = vunpack.c.l.b16 %v1175
    %v1208 = vunpack.c.l.b16 %v1176
    %v1209 = vunpack.c.l.b16 %v1177
    %v1210 = vunpack.c.l.b16 %v1178
    %v1211 = vunpack.c.l.b16 %v1179
    %v1212 = vunpack.c.l.b16 %v1180
    %v1213 = vunpack.c.l.b16 %v1181
    %v1214 = vunpack.c.l.b16 %v1182
    %v1215 = vunpack.c.l.b16 %v1183
    %v1216 = vunpack.c.l.b16 %v1184
    %v1217 = vpack.c.b16 %v1202, %v1201
    %v1218 = vpack.c.b16 %v1204, %v1203
    %v1219 = vpack.c.b16 %v1206, %v1205
    %v1220 = vpack.c.b16 %v1208, %v1207
    %v1221 = vpack.c.b16 %v1210, %v1209
    %v1222 = vpack.c.b16 %v1212, %v1211
    %v1223 = vpack.c.b16 %v1214, %v1213
    %v1224 = vpack.c.b16 %v1216, %v1215
    %1233 = vmatprep.subr.bf16.mxu0 0
    %1234 = vmatpush1.bf16.msra.mxu0 %v1217
    %1235 = vmatprep.subr.bf16.mxu0 0
    %1236 = vmatpush1.bf16.msra.mxu0 %v1218
    %1237 = vmatprep.subr.bf16.mxu0 0
    %1238 = vmatpush1.bf16.msra.mxu0 %v1219
    %1239 = vmatprep.subr.bf16.mxu0 0
    %1240 = vmatpush1.bf16.msra.mxu0 %v1220
    %1241 = vmatprep.subr.bf16.mxu0 0
    %1242 = vmatpush1.bf16.msra.mxu0 %v1221
    %1243 = vmatprep.subr.bf16.mxu0 0
    %1244 = vmatpush1.bf16.msra.mxu0 %v1222
    %1245 = vmatprep.subr.bf16.mxu0 0
    %1246 = vmatpush1.bf16.msra.mxu0 %v1223
    %1247 = vmatprep.subr.bf16.mxu0 0
    %1248 = vmatpush1.bf16.msra.mxu0 %v1224
    %1249 = vmatprep.subr.bf16.mxu0 0
    %1250 = vmatpush1.bf16.msra.mxu0 0
    %1251 = vmatprep.subr.bf16.mxu0 0
    %1252 = vmatpush1.bf16.msra.mxu0 0
    %1253 = vmatprep.subr.bf16.mxu0 0
    %1254 = vmatpush1.bf16.msra.mxu0 0
    %1255 = vmatprep.subr.bf16.mxu0 0
    %1256 = vmatpush1.bf16.msra.mxu0 0
    %1257 = vmatprep.subr.bf16.mxu0 0
    %1258 = vmatpush1.bf16.msra.mxu0 0
    %1259 = vmatprep.subr.bf16.mxu0 0
    %1260 = vmatpush1.bf16.msra.mxu0 0
    %1261 = vmatprep.subr.bf16.mxu0 0
    %1262 = vmatpush1.bf16.msra.mxu0 0
    %1263 = vmatprep.subr.bf16.mxu0 0
    %1264 = vmatpush1.bf16.msra.mxu0 0
    %1265 = vmatprep.mubr.bf16.mxu0 0
    %1266 = vmatmul.mubr.bf16.gmra.mrb[0].mxu0 %v1160
    %v1267 = vpop.f32.mrb[0].mxu0
    %v1268 = vadd.f32 0.0, %v1267
    %v1269 = vpop.f32.mrb[0].mxu0
    %v1270 = vpop.f32.mrb[0].mxu0
    %v1271 = vadd.f32 0.0, %v1270
    %v1272 = vpop.f32.mrb[0].mxu0
    %1273 = vmatprep.mubr.bf16.mxu0 0
    %1274 = vmatmul.mubr.bf16.gmra.mrb[0].mxu0 %v1161
    %v1275 = vpop.f32.mrb[0].mxu0
    %v1276 = vadd.f32 0.0, %v1275
    %v1277 = vpop.f32.mrb[0].mxu0
    %v1278 = vpop.f32.mrb[0].mxu0
    %v1279 = vadd.f32 0.0, %v1278
    %v1280 = vpop.f32.mrb[0].mxu0
    %1281 = vmatprep.mubr.bf16.mxu0 0
    %1282 = vmatmul.mubr.bf16.gmra.mrb[0].mxu0 %v1162
    %v1283 = vpop.f32.mrb[0].mxu0
    %v1284 = vadd.f32 0.0, %v1283
    %v1285 = vpop.f32.mrb[0].mxu0
    %v1286 = vpop.f32.mrb[0].mxu0
    %v1287 = vadd.f32 0.0, %v1286
    %v1288 = vpop.f32.mrb[0].mxu0
    %1289 = vmatprep.mubr.bf16.mxu0 0
    %1290 = vmatmul.mubr.bf16.gmra.mrb[0].mxu0 %v1163
    %v1291 = vpop.f32.mrb[0].mxu0
    %v1292 = vadd.f32 0.0, %v1291
    %v1293 = vpop.f32.mrb[0].mxu0
    %v1294 = vpop.f32.mrb[0].mxu0
    %v1295 = vadd.f32 0.0, %v1294
    %v1296 = vpop.f32.mrb[0].mxu0
    %1297 = vmatprep.mubr.bf16.mxu0 0
    %1298 = vmatmul.mubr.bf16.gmra.mrb[0].mxu0 %v1164
    %v1299 = vpop.f32.mrb[0].mxu0
    %v1300 = vadd.f32 0.0, %v1299
    %v1301 = vpop.f32.mrb[0].mxu0
    %v1302 = vpop.f32.mrb[0].mxu0
    %v1303 = vadd.f32 0.0, %v1302
    %v1304 = vpop.f32.mrb[0].mxu0
    %1305 = vmatprep.mubr.bf16.mxu0 0
    %1306 = vmatmul.mubr.bf16.gmra.mrb[0].mxu0 %v1165
    %v1307 = vpop.f32.mrb[0].mxu0
    %v1308 = vadd.f32 0.0, %v1307
    %v1309 = vpop.f32.mrb[0].mxu0
    %v1310 = vpop.f32.mrb[0].mxu0
    %v1311 = vadd.f32 0.0, %v1310
    %v1312 = vpop.f32.mrb[0].mxu0
    %1313 = vmatprep.mubr.bf16.mxu0 0
    %1314 = vmatmul.mubr.bf16.gmra.mrb[0].mxu0 %v1166
    %v1315 = vpop.f32.mrb[0].mxu0
    %v1316 = vadd.f32 0.0, %v1315
    %v1317 = vpop.f32.mrb[0].mxu0
    %v1318 = vpop.f32.mrb[0].mxu0
    %v1319 = vadd.f32 0.0, %v1318
    %v1320 = vpop.f32.mrb[0].mxu0
    %1321 = vmatprep.mubr.bf16.mxu0 0
    %1322 = vmatmul.mubr.bf16.gmra.mrb[0].mxu0 %v1167
    %v1323 = vpop.f32.mrb[0].mxu0
    %v1324 = vadd.f32 0.0, %v1323
    %v1325 = vpop.f32.mrb[0].mxu0
    %v1326 = vpop.f32.mrb[0].mxu0
    %v1327 = vadd.f32 0.0, %v1326
    %v1328 = vpop.f32.mrb[0].mxu0
    %1329 = vdwg.mxu0
    %v1330 = vlaneseq
    %v1331 = vshrl.u32 %v1330, 7
    %v1332 = vsub.s32 0, %v1331
    %v1333 = vrot.slane %v993, %v1332
    %1334 = vmatprep.subr.mxu0 0.0
    %1335 = vmatpush1.msra.mxu0 %v1268
    %1336 = vmatprep.subr.mxu0 0.0
    %1337 = vmatpush1.msra.mxu0 %v1271
    %1338 = vmatprep.subr.mxu0 0.0
    %1339 = vmatpush1.msra.mxu0 %v1276
    %1340 = vmatprep.subr.mxu0 0.0
    %1341 = vmatpush1.msra.mxu0 %v1279
    %1342 = vmatprep.subr.mxu0 0.0
    %1343 = vmatpush1.msra.mxu0 %v1284
    %1344 = vmatprep.subr.mxu0 0.0
    %1345 = vmatpush1.msra.mxu0 %v1287
    %1346 = vmatprep.subr.mxu0 0.0
    %1347 = vmatpush1.msra.mxu0 %v1292
    %1348 = vmatprep.subr.mxu0 0.0
    %1349 = vmatpush1.msra.mxu0 %v1295
    %1350 = vmatprep.subr.mxu0 0.0
    %1351 = vmatpush1.msra.mxu0 %v1300
    %1352 = vmatprep.subr.mxu0 0.0
    %1353 = vmatpush1.msra.mxu0 %v1303
    %1354 = vmatprep.subr.mxu0 0.0
    %1355 = vmatpush1.msra.mxu0 %v1308
    %1356 = vmatprep.subr.mxu0 0.0
    %1357 = vmatpush1.msra.mxu0 %v1311
    %1358 = vmatprep.subr.mxu0 0.0
    %1359 = vmatpush1.msra.mxu0 %v1316
    %1360 = vmatprep.subr.mxu0 0.0
    %1361 = vmatpush1.msra.mxu0 %v1319
    %1362 = vmatprep.subr.mxu0 0.0
    %1363 = vmatpush1.msra.mxu0 %v1324
    %1364 = vmatprep.subr.mxu0 0.0
    %1365 = vmatpush1.msra.mxu0 %v1327
    %1366 = vmatprep.subr.mxu0 0.0
    %1367 = vmatpush1.msra.mxu0 0.0
    %1368 = vmatprep.subr.mxu0 0.0
    %1369 = vmatpush1.msra.mxu0 0.0
    %1370 = vmatprep.subr.mxu0 0.0
    %1371 = vmatpush1.msra.mxu0 0.0
    %1372 = vmatprep.subr.mxu0 0.0
    %1373 = vmatpush1.msra.mxu0 0.0
    %1374 = vmatprep.subr.mxu0 0.0
    %1375 = vmatpush1.msra.mxu0 0.0
    %1376 = vmatprep.subr.mxu0 0.0
    %1377 = vmatpush1.msra.mxu0 0.0
    %1378 = vmatprep.subr.mxu0 0.0
    %1379 = vmatpush1.msra.mxu0 0.0
    %1380 = vmatprep.subr.mxu0 0.0
    %1381 = vmatpush1.msra.mxu0 0.0
    %1382 = vmatprep.subr.mxu0 0.0
    %1383 = vmatpush1.msra.mxu0 0.0
    %1384 = vmatprep.subr.mxu0 0.0
    %1385 = vmatpush1.msra.mxu0 0.0
    %1386 = vmatprep.subr.mxu0 0.0
    %1387 = vmatpush1.msra.mxu0 0.0
    %1388 = vmatprep.subr.mxu0 0.0
    %1389 = vmatpush1.msra.mxu0 0.0
    %1390 = vmatprep.subr.mxu0 0.0
    %1391 = vmatpush1.msra.mxu0 0.0
    %1392 = vmatprep.subr.mxu0 0.0
    %1393 = vmatpush1.msra.mxu0 0.0
    %1394 = vmatprep.subr.mxu0 0.0
    %1395 = vmatpush1.msra.mxu0 0.0
    %1396 = vmatprep.subr.mxu0 0.0
    %1397 = vmatpush1.msra.mxu0 0.0
    %1398 = vmatprep.mubr.f32.mxu0 0.0
    %1399 = vmatmul.mubr.f32.gmra.mrb[0].mxu0 %v103
    %v1400 = vpop.f32.mrb[0].mxu0
    %v1401 = vadd.f32 %v1333, %v1400
    %v1402 = vpop.f32.mrb[0].mxu0
    %1403 = vmatprep.mubr.f32.mxu0 0.0
    %1404 = vmatmul.mubr.f32.gmra.mrb[0].mxu0 %v104
    %v1405 = vpop.f32.mrb[0].mxu0
    %v1406 = vadd.f32 %v1333, %v1405
    %v1407 = vpop.f32.mrb[0].mxu0
    %1408 = vmatprep.mubr.f32.mxu0 0.0
    %1409 = vmatmul.mubr.f32.gmra.mrb[0].mxu0 %v105
    %v1410 = vpop.f32.mrb[0].mxu0
    %v1411 = vadd.f32 %v1333, %v1410
    %v1412 = vpop.f32.mrb[0].mxu0
    %1413 = vmatprep.mubr.f32.mxu0 0.0
    %1414 = vmatmul.mubr.f32.gmra.mrb[0].mxu0 %v106
    %v1415 = vpop.f32.mrb[0].mxu0
    %v1416 = vadd.f32 %v1333, %v1415
    %v1417 = vpop.f32.mrb[0].mxu0
    %1418 = vmatprep.mubr.f32.mxu0 0.0
    %1419 = vmatmul.mubr.f32.gmra.mrb[0].mxu0 %v107
    %v1420 = vpop.f32.mrb[0].mxu0
    %v1421 = vadd.f32 %v1333, %v1420
    %v1422 = vpop.f32.mrb[0].mxu0
    %1423 = vmatprep.mubr.f32.mxu0 0.0
    %1424 = vmatmul.mubr.f32.gmra.mrb[0].mxu0 %v108
    %v1425 = vpop.f32.mrb[0].mxu0
    %v1426 = vadd.f32 %v1333, %v1425
    %v1427 = vpop.f32.mrb[0].mxu0
    %1428 = vmatprep.mubr.f32.mxu0 0.0
    %1429 = vmatmul.mubr.f32.gmra.mrb[0].mxu0 %v109
    %v1430 = vpop.f32.mrb[0].mxu0
    %v1431 = vadd.f32 %v1333, %v1430
    %v1432 = vpop.f32.mrb[0].mxu0
    %1433 = vmatprep.mubr.f32.mxu0 0.0
    %1434 = vmatmul.mubr.f32.gmra.mrb[0].mxu0 %v110
    %v1435 = vpop.f32.mrb[0].mxu0
    %v1436 = vadd.f32 %v1333, %v1435
    %v1437 = vpop.f32.mrb[0].mxu0
    %1438 = vmatprep.mubr.f32.mxu0 0.0
    %1439 = vmatmul.mubr.f32.gmra.mrb[0].mxu0 %v111
    %v1440 = vpop.f32.mrb[0].mxu0
    %v1441 = vadd.f32 %v1333, %v1440
    %v1442 = vpop.f32.mrb[0].mxu0
    %1443 = vmatprep.mubr.f32.mxu0 0.0
    %1444 = vmatmul.mubr.f32.gmra.mrb[0].mxu0 %v112
    %v1445 = vpop.f32.mrb[0].mxu0
    %v1446 = vadd.f32 %v1333, %v1445
    %v1447 = vpop.f32.mrb[0].mxu0
    %1448 = vmatprep.mubr.f32.mxu0 0.0
    %1449 = vmatmul.mubr.f32.gmra.mrb[0].mxu0 %v113
    %v1450 = vpop.f32.mrb[0].mxu0
    %v1451 = vadd.f32 %v1333, %v1450
    %v1452 = vpop.f32.mrb[0].mxu0
    %1453 = vmatprep.mubr.f32.mxu0 0.0
    %1454 = vmatmul.mubr.f32.gmra.mrb[0].mxu0 %v114
    %v1455 = vpop.f32.mrb[0].mxu0
    %v1456 = vadd.f32 %v1333, %v1455
    %v1457 = vpop.f32.mrb[0].mxu0
    %1458 = vmatprep.mubr.f32.mxu0 0.0
    %1459 = vmatmul.mubr.f32.gmra.mrb[0].mxu0 %v115
    %v1460 = vpop.f32.mrb[0].mxu0
    %v1461 = vadd.f32 %v1333, %v1460
    %v1462 = vpop.f32.mrb[0].mxu0
    %1463 = vmatprep.mubr.f32.mxu0 0.0
    %1464 = vmatmul.mubr.f32.gmra.mrb[0].mxu0 %v116
    %v1465 = vpop.f32.mrb[0].mxu0
    %v1466 = vadd.f32 %v1333, %v1465
    %v1467 = vpop.f32.mrb[0].mxu0
    %1468 = vmatprep.mubr.f32.mxu0 0.0
    %1469 = vmatmul.mubr.f32.gmra.mrb[0].mxu0 %v117
    %v1470 = vpop.f32.mrb[0].mxu0
    %v1471 = vadd.f32 %v1333, %v1470
    %v1472 = vpop.f32.mrb[0].mxu0
    %1473 = vmatprep.mubr.f32.mxu0 0.0
    %1474 = vmatmul.mubr.f32.gmra.mrb[0].mxu0 %v118
    %v1475 = vpop.f32.mrb[0].mxu0
    %v1476 = vadd.f32 %v1333, %v1475
    %v1477 = vpop.f32.mrb[0].mxu0
    %1478 = vdwg.mxu0
    %v1479 = vmax.f32 %v1401, 0.0
    %v1480 = vmax.f32 %v1406, 0.0
    %v1481 = vmax.f32 %v1411, 0.0
    %v1482 = vmax.f32 %v1416, 0.0
    %v1483 = vmax.f32 %v1421, 0.0
    %v1484 = vmax.f32 %v1426, 0.0
    %v1485 = vmax.f32 %v1431, 0.0
    %v1486 = vmax.f32 %v1436, 0.0
    %v1487 = vmax.f32 %v1441, 0.0
    %v1488 = vmax.f32 %v1446, 0.0
    %v1489 = vmax.f32 %v1451, 0.0
    %v1490 = vmax.f32 %v1456, 0.0
    %v1491 = vmax.f32 %v1461, 0.0
    %v1492 = vmax.f32 %v1466, 0.0
    %v1493 = vmax.f32 %v1471, 0.0
    %v1494 = vmax.f32 %v1476, 0.0
    %v1495 = vld [vmem:[%s3 + $0x8] sm:$0x1]
    %v1496 = vld [vmem:[%s3 + $0x9] sm:$0x1]
    %v1497 = vld [vmem:[%s3 + $0xa] sm:$0x1]
    %v1498 = vmul.f32 %v1479, %v87
    %v1499 = vmul.f32 %v1480, %v88
    %v1500 = vmul.f32 %v1481, %v89
    %v1501 = vmul.f32 %v1482, %v90
    %v1502 = vmul.f32 %v1483, %v91
    %v1503 = vmul.f32 %v1484, %v92
    %v1504 = vmul.f32 %v1485, %v93
    %v1505 = vmul.f32 %v1486, %v94
    %v1506 = vmul.f32 %v1487, %v95
    %v1507 = vmul.f32 %v1488, %v96
    %v1508 = vmul.f32 %v1489, %v97
    %v1509 = vmul.f32 %v1490, %v98
    %v1510 = vmul.f32 %v1491, %v99
    %v1511 = vmul.f32 %v1492, %v100
    %v1512 = vmul.f32 %v1493, %v101
    %v1513 = vmul.f32 %v1494, %v102
    %v1514 = vadd.f32 %v1498, %v1499
    %v1515 = vadd.f32 %v1514, %v1500
    %v1516 = vadd.f32 %v1515, %v1501
    %v1517 = vadd.f32 %v1516, %v1502
    %v1518 = vadd.f32 %v1517, %v1503
    %v1519 = vadd.f32 %v1518, %v1504
    %v1520 = vadd.f32 %v1519, %v1505
    %v1521 = vadd.f32 %v1520, %v1506
    %v1522 = vadd.f32 %v1521, %v1507
    %v1523 = vadd.f32 %v1522, %v1508
    %v1524 = vadd.f32 %v1523, %v1509
    %v1525 = vadd.f32 %v1524, %v1510
    %v1526 = vadd.f32 %v1525, %v1511
    %v1527 = vadd.f32 %v1526, %v1512
    %v1528 = vadd.f32 %v1527, %v1513
    %v1529 = vrot.slane %v1528, 4
    %v1530 = vadd.f32 %v1528, %v1529
    %v1531 = vrot.slane %v1530, 2
    %v1532 = vadd.f32 %v1530, %v1531
    %v1533 = vrot.slane %v1532, 1
    %v1534 = vadd.f32 %v1532, %v1533
    %v1535 = vmul.f32 %v1534, 0.0625
    %v1536 = vsub.f32 %v1479, %v1535
    %v1537 = vsub.f32 %v1480, %v1535
    %v1538 = vsub.f32 %v1481, %v1535
    %v1539 = vsub.f32 %v1482, %v1535
    %v1540 = vsub.f32 %v1483, %v1535
    %v1541 = vsub.f32 %v1484, %v1535
    %v1542 = vsub.f32 %v1485, %v1535
    %v1543 = vsub.f32 %v1486, %v1535
    %v1544 = vsub.f32 %v1487, %v1535
    %v1545 = vsub.f32 %v1488, %v1535
    %v1546 = vsub.f32 %v1489, %v1535
    %v1547 = vsub.f32 %v1490, %v1535
    %v1548 = vsub.f32 %v1491, %v1535
    %v1549 = vsub.f32 %v1492, %v1535
    %v1550 = vsub.f32 %v1493, %v1535
    %v1551 = vsub.f32 %v1494, %v1535
    %v1552 = vmul.f32 %v1536, %v87
    %v1553 = vmul.f32 %v1537, %v88
    %v1554 = vmul.f32 %v1538, %v89
    %v1555 = vmul.f32 %v1539, %v90
    %v1556 = vmul.f32 %v1540, %v91
    %v1557 = vmul.f32 %v1541, %v92
    %v1558 = vmul.f32 %v1542, %v93
    %v1559 = vmul.f32 %v1543, %v94
    %v1560 = vmul.f32 %v1544, %v95
    %v1561 = vmul.f32 %v1545, %v96
    %v1562 = vmul.f32 %v1546, %v97
    %v1563 = vmul.f32 %v1547, %v98
    %v1564 = vmul.f32 %v1548, %v99
    %v1565 = vmul.f32 %v1549, %v100
    %v1566 = vmul.f32 %v1550, %v101
    %v1567 = vmul.f32 %v1551, %v102
    %v1568 = vmul.f32 %v1552, %v1552
    %v1569 = vmul.f32 %v1553, %v1553
    %v1570 = vmul.f32 %v1554, %v1554
    %v1571 = vmul.f32 %v1555, %v1555
    %v1572 = vmul.f32 %v1556, %v1556
    %v1573 = vmul.f32 %v1557, %v1557
    %v1574 = vmul.f32 %v1558, %v1558
    %v1575 = vmul.f32 %v1559, %v1559
    %v1576 = vmul.f32 %v1560, %v1560
    %v1577 = vmul.f32 %v1561, %v1561
    %v1578 = vmul.f32 %v1562, %v1562
    %v1579 = vmul.f32 %v1563, %v1563
    %v1580 = vmul.f32 %v1564, %v1564
    %v1581 = vmul.f32 %v1565, %v1565
    %v1582 = vmul.f32 %v1566, %v1566
    %v1583 = vmul.f32 %v1567, %v1567
    %v1584 = vadd.f32 %v1568, %v1569
    %v1585 = vadd.f32 %v1584, %v1570
    %v1586 = vadd.f32 %v1585, %v1571
    %v1587 = vadd.f32 %v1586, %v1572
    %v1588 = vadd.f32 %v1587, %v1573
    %v1589 = vadd.f32 %v1588, %v1574
    %v1590 = vadd.f32 %v1589, %v1575
    %v1591 = vadd.f32 %v1590, %v1576
    %v1592 = vadd.f32 %v1591, %v1577
    %v1593 = vadd.f32 %v1592, %v1578
    %v1594 = vadd.f32 %v1593, %v1579
    %v1595 = vadd.f32 %v1594, %v1580
    %v1596 = vadd.f32 %v1595, %v1581
    %v1597 = vadd.f32 %v1596, %v1582
    %v1598 = vadd.f32 %v1597, %v1583
    %v1599 = vrot.slane %v1598, 4
    %v1600 = vadd.f32 %v1598, %v1599
    %v1601 = vrot.slane %v1600, 2
    %v1602 = vadd.f32 %v1600, %v1601
    %v1603 = vrot.slane %v1602, 1
    %v1604 = vadd.f32 %v1602, %v1603
    %v1605 = vmul.f32 %v1604, 0.0625
    %v1606 = vlaneseq
    %v1607 = vshrl.u32 %v1606, 7
    %v1608 = vsub.s32 0, %v1607
    %v1609 = vrot.slane %v1495, %v1608
    %v1610 = vmul.f32 %v1609, %v1536
    %v1611 = vmul.f32 %v1609, %v1537
    %v1612 = vmul.f32 %v1609, %v1538
    %v1613 = vmul.f32 %v1609, %v1539
    %v1614 = vmul.f32 %v1609, %v1540
    %v1615 = vmul.f32 %v1609, %v1541
    %v1616 = vmul.f32 %v1609, %v1542
    %v1617 = vmul.f32 %v1609, %v1543
    %v1618 = vmul.f32 %v1609, %v1544
    %v1619 = vmul.f32 %v1609, %v1545
    %v1620 = vmul.f32 %v1609, %v1546
    %v1621 = vmul.f32 %v1609, %v1547
    %v1622 = vmul.f32 %v1609, %v1548
    %v1623 = vmul.f32 %v1609, %v1549
    %v1624 = vmul.f32 %v1609, %v1550
    %v1625 = vmul.f32 %v1609, %v1551
    %v1626 = vadd.f32 %v1605, 1e-05
    %v1627 = vrsqrt.pop %v1626
    %v1628 = vmul.f32 %v1610, %v1627
    %v1629 = vmul.f32 %v1611, %v1627
    %v1630 = vmul.f32 %v1612, %v1627
    %v1631 = vmul.f32 %v1613, %v1627
    %v1632 = vmul.f32 %v1614, %v1627
    %v1633 = vmul.f32 %v1615, %v1627
    %v1634 = vmul.f32 %v1616, %v1627
    %v1635 = vmul.f32 %v1617, %v1627
    %v1636 = vmul.f32 %v1618, %v1627
    %v1637 = vmul.f32 %v1619, %v1627
    %v1638 = vmul.f32 %v1620, %v1627
    %v1639 = vmul.f32 %v1621, %v1627
    %v1640 = vmul.f32 %v1622, %v1627
    %v1641 = vmul.f32 %v1623, %v1627
    %v1642 = vmul.f32 %v1624, %v1627
    %v1643 = vmul.f32 %v1625, %v1627
    %v1644 = vlaneseq
    %v1645 = vshrl.u32 %v1644, 7
    %v1646 = vsub.s32 0, %v1645
    %v1647 = vrot.slane %v1496, %v1646
    %v1648 = vadd.f32 %v1628, %v1647
    %v1649 = vadd.f32 %v1629, %v1647
    %v1650 = vadd.f32 %v1630, %v1647
    %v1651 = vadd.f32 %v1631, %v1647
    %v1652 = vadd.f32 %v1632, %v1647
    %v1653 = vadd.f32 %v1633, %v1647
    %v1654 = vadd.f32 %v1634, %v1647
    %v1655 = vadd.f32 %v1635, %v1647
    %v1656 = vadd.f32 %v1636, %v1647
    %v1657 = vadd.f32 %v1637, %v1647
    %v1658 = vadd.f32 %v1638, %v1647
    %v1659 = vadd.f32 %v1639, %v1647
    %v1660 = vadd.f32 %v1640, %v1647
    %v1661 = vadd.f32 %v1641, %v1647
    %v1662 = vadd.f32 %v1642, %v1647
    %v1663 = vadd.f32 %v1643, %v1647
    %v1664 = vpack.c.bf16 %v1649, %v1648
    %v1665 = vpack.c.bf16 %v1651, %v1650
    %v1666 = vpack.c.bf16 %v1653, %v1652
    %v1667 = vpack.c.bf16 %v1655, %v1654
    %v1668 = vpack.c.bf16 %v1657, %v1656
    %v1669 = vpack.c.bf16 %v1659, %v1658
    %v1670 = vpack.c.bf16 %v1661, %v1660
    %v1671 = vpack.c.bf16 %v1663, %v1662
    %s1672 = scalar_lea.vmem %s5, 128
    %v1673 = vld [vmem:[%s1672] sm:$0xf]
    %v1674 = vld [vmem:[%s1672 + $0x4] sm:$0xf]
    %v1675 = vld [vmem:[%s1672 + $0x8] sm:$0xf]
    %v1676 = vld [vmem:[%s1672 + $0xc] sm:$0xf]
    %v1677 = vld [vmem:[%s1672 + $0x10] sm:$0xf]
    %v1678 = vld [vmem:[%s1672 + $0x14] sm:$0xf]
    %v1679 = vld [vmem:[%s1672 + $0x18] sm:$0xf]
    %v1680 = vld [vmem:[%s1672 + $0x1c] sm:$0xf]
    %v1681 = vld [vmem:[%s1672 + $0x20] sm:$0xf]
    %v1682 = vld [vmem:[%s1672 + $0x24] sm:$0xf]
    %v1683 = vld [vmem:[%s1672 + $0x28] sm:$0xf]
    %v1684 = vld [vmem:[%s1672 + $0x2c] sm:$0xf]
    %v1685 = vld [vmem:[%s1672 + $0x30] sm:$0xf]
    %v1686 = vld [vmem:[%s1672 + $0x34] sm:$0xf]
    %v1687 = vld [vmem:[%s1672 + $0x38] sm:$0xf]
    %v1688 = vld [vmem:[%s1672 + $0x3c] sm:$0xf]
    %v1705 = vunpack.c.l.b16 %v1673
    %v1706 = vunpack.c.l.b16 %v1674
    %v1707 = vunpack.c.l.b16 %v1675
    %v1708 = vunpack.c.l.b16 %v1676
    %v1709 = vunpack.c.l.b16 %v1677
    %v1710 = vunpack.c.l.b16 %v1678
    %v1711 = vunpack.c.l.b16 %v1679
    %v1712 = vunpack.c.l.b16 %v1680
    %v1713 = vunpack.c.l.b16 %v1681
    %v1714 = vunpack.c.l.b16 %v1682
    %v1715 = vunpack.c.l.b16 %v1683
    %v1716 = vunpack.c.l.b16 %v1684
    %v1717 = vunpack.c.l.b16 %v1685
    %v1718 = vunpack.c.l.b16 %v1686
    %v1719 = vunpack.c.l.b16 %v1687
    %v1720 = vunpack.c.l.b16 %v1688
    %v1721 = vpack.c.b16 %v1706, %v1705
    %v1722 = vpack.c.b16 %v1708, %v1707
    %v1723 = vpack.c.b16 %v1710, %v1709
    %v1724 = vpack.c.b16 %v1712, %v1711
    %v1725 = vpack.c.b16 %v1714, %v1713
    %v1726 = vpack.c.b16 %v1716, %v1715
    %v1727 = vpack.c.b16 %v1718, %v1717
    %v1728 = vpack.c.b16 %v1720, %v1719
    %1737 = vmatprep.subr.bf16.mxu0 0
    %1738 = vmatpush1.bf16.msra.mxu0 %v1721
    %1739 = vmatprep.subr.bf16.mxu0 0
    %1740 = vmatpush1.bf16.msra.mxu0 %v1722
    %1741 = vmatprep.subr.bf16.mxu0 0
    %1742 = vmatpush1.bf16.msra.mxu0 %v1723
    %1743 = vmatprep.subr.bf16.mxu0 0
    %1744 = vmatpush1.bf16.msra.mxu0 %v1724
    %1745 = vmatprep.subr.bf16.mxu0 0
    %1746 = vmatpush1.bf16.msra.mxu0 %v1725
    %1747 = vmatprep.subr.bf16.mxu0 0
    %1748 = vmatpush1.bf16.msra.mxu0 %v1726
    %1749 = vmatprep.subr.bf16.mxu0 0
    %1750 = vmatpush1.bf16.msra.mxu0 %v1727
    %1751 = vmatprep.subr.bf16.mxu0 0
    %1752 = vmatpush1.bf16.msra.mxu0 %v1728
    %1753 = vmatprep.subr.bf16.mxu0 0
    %1754 = vmatpush1.bf16.msra.mxu0 0
    %1755 = vmatprep.subr.bf16.mxu0 0
    %1756 = vmatpush1.bf16.msra.mxu0 0
    %1757 = vmatprep.subr.bf16.mxu0 0
    %1758 = vmatpush1.bf16.msra.mxu0 0
    %1759 = vmatprep.subr.bf16.mxu0 0
    %1760 = vmatpush1.bf16.msra.mxu0 0
    %1761 = vmatprep.subr.bf16.mxu0 0
    %1762 = vmatpush1.bf16.msra.mxu0 0
    %1763 = vmatprep.subr.bf16.mxu0 0
    %1764 = vmatpush1.bf16.msra.mxu0 0
    %1765 = vmatprep.subr.bf16.mxu0 0
    %1766 = vmatpush1.bf16.msra.mxu0 0
    %1767 = vmatprep.subr.bf16.mxu0 0
    %1768 = vmatpush1.bf16.msra.mxu0 0
    %1769 = vmatprep.mubr.bf16.mxu0 0
    %1770 = vmatmul.mubr.bf16.gmra.mrb[0].mxu0 %v1664
    %v1771 = vpop.f32.mrb[0].mxu0
    %v1772 = vadd.f32 0.0, %v1771
    %v1773 = vpop.f32.mrb[0].mxu0
    %v1774 = vpop.f32.mrb[0].mxu0
    %v1775 = vadd.f32 0.0, %v1774
    %v1776 = vpop.f32.mrb[0].mxu0
    %1777 = vmatprep.mubr.bf16.mxu0 0
    %1778 = vmatmul.mubr.bf16.gmra.mrb[0].mxu0 %v1665
    %v1779 = vpop.f32.mrb[0].mxu0
    %v1780 = vadd.f32 0.0, %v1779
    %v1781 = vpop.f32.mrb[0].mxu0
    %v1782 = vpop.f32.mrb[0].mxu0
    %v1783 = vadd.f32 0.0, %v1782
    %v1784 = vpop.f32.mrb[0].mxu0
    %1785 = vmatprep.mubr.bf16.mxu0 0
    %1786 = vmatmul.mubr.bf16.gmra.mrb[0].mxu0 %v1666
    %v1787 = vpop.f32.mrb[0].mxu0
    %v1788 = vadd.f32 0.0, %v1787
    %v1789 = vpop.f32.mrb[0].mxu0
    %v1790 = vpop.f32.mrb[0].mxu0
    %v1791 = vadd.f32 0.0, %v1790
    %v1792 = vpop.f32.mrb[0].mxu0
    %1793 = vmatprep.mubr.bf16.mxu0 0
    %1794 = vmatmul.mubr.bf16.gmra.mrb[0].mxu0 %v1667
    %v1795 = vpop.f32.mrb[0].mxu0
    %v1796 = vadd.f32 0.0, %v1795
    %v1797 = vpop.f32.mrb[0].mxu0
    %v1798 = vpop.f32.mrb[0].mxu0
    %v1799 = vadd.f32 0.0, %v1798
    %v1800 = vpop.f32.mrb[0].mxu0
    %1801 = vmatprep.mubr.bf16.mxu0 0
    %1802 = vmatmul.mubr.bf16.gmra.mrb[0].mxu0 %v1668
    %v1803 = vpop.f32.mrb[0].mxu0
    %v1804 = vadd.f32 0.0, %v1803
    %v1805 = vpop.f32.mrb[0].mxu0
    %v1806 = vpop.f32.mrb[0].mxu0
    %v1807 = vadd.f32 0.0, %v1806
    %v1808 = vpop.f32.mrb[0].mxu0
    %1809 = vmatprep.mubr.bf16.mxu0 0
    %1810 = vmatmul.mubr.bf16.gmra.mrb[0].mxu0 %v1669
    %v1811 = vpop.f32.mrb[0].mxu0
    %v1812 = vadd.f32 0.0, %v1811
    %v1813 = vpop.f32.mrb[0].mxu0
    %v1814 = vpop.f32.mrb[0].mxu0
    %v1815 = vadd.f32 0.0, %v1814
    %v1816 = vpop.f32.mrb[0].mxu0
    %1817 = vmatprep.mubr.bf16.mxu0 0
    %1818 = vmatmul.mubr.bf16.gmra.mrb[0].mxu0 %v1670
    %v1819 = vpop.f32.mrb[0].mxu0
    %v1820 = vadd.f32 0.0, %v1819
    %v1821 = vpop.f32.mrb[0].mxu0
    %v1822 = vpop.f32.mrb[0].mxu0
    %v1823 = vadd.f32 0.0, %v1822
    %v1824 = vpop.f32.mrb[0].mxu0
    %1825 = vmatprep.mubr.bf16.mxu0 0
    %1826 = vmatmul.mubr.bf16.gmra.mrb[0].mxu0 %v1671
    %v1827 = vpop.f32.mrb[0].mxu0
    %v1828 = vadd.f32 0.0, %v1827
    %v1829 = vpop.f32.mrb[0].mxu0
    %v1830 = vpop.f32.mrb[0].mxu0
    %v1831 = vadd.f32 0.0, %v1830
    %v1832 = vpop.f32.mrb[0].mxu0
    %1833 = vdwg.mxu0
    %v1834 = vlaneseq
    %v1835 = vshrl.u32 %v1834, 7
    %v1836 = vsub.s32 0, %v1835
    %v1837 = vrot.slane %v1497, %v1836
    %1838 = vmatprep.subr.mxu0 0.0
    %1839 = vmatpush1.msra.mxu0 %v1772
    %1840 = vmatprep.subr.mxu0 0.0
    %1841 = vmatpush1.msra.mxu0 %v1775
    %1842 = vmatprep.subr.mxu0 0.0
    %1843 = vmatpush1.msra.mxu0 %v1780
    %1844 = vmatprep.subr.mxu0 0.0
    %1845 = vmatpush1.msra.mxu0 %v1783
    %1846 = vmatprep.subr.mxu0 0.0
    %1847 = vmatpush1.msra.mxu0 %v1788
    %1848 = vmatprep.subr.mxu0 0.0
    %1849 = vmatpush1.msra.mxu0 %v1791
    %1850 = vmatprep.subr.mxu0 0.0
    %1851 = vmatpush1.msra.mxu0 %v1796
    %1852 = vmatprep.subr.mxu0 0.0
    %1853 = vmatpush1.msra.mxu0 %v1799
    %1854 = vmatprep.subr.mxu0 0.0
    %1855 = vmatpush1.msra.mxu0 %v1804
    %1856 = vmatprep.subr.mxu0 0.0
    %1857 = vmatpush1.msra.mxu0 %v1807
    %1858 = vmatprep.subr.mxu0 0.0
    %1859 = vmatpush1.msra.mxu0 %v1812
    %1860 = vmatprep.subr.mxu0 0.0
    %1861 = vmatpush1.msra.mxu0 %v1815
    %1862 = vmatprep.subr.mxu0 0.0
    %1863 = vmatpush1.msra.mxu0 %v1820
    %1864 = vmatprep.subr.mxu0 0.0
    %1865 = vmatpush1.msra.mxu0 %v1823
    %1866 = vmatprep.subr.mxu0 0.0
    %1867 = vmatpush1.msra.mxu0 %v1828
    %1868 = vmatprep.subr.mxu0 0.0
    %1869 = vmatpush1.msra.mxu0 %v1831
    %1870 = vmatprep.subr.mxu0 0.0
    %1871 = vmatpush1.msra.mxu0 0.0
    %1872 = vmatprep.subr.mxu0 0.0
    %1873 = vmatpush1.msra.mxu0 0.0
    %1874 = vmatprep.subr.mxu0 0.0
    %1875 = vmatpush1.msra.mxu0 0.0
    %1876 = vmatprep.subr.mxu0 0.0
    %1877 = vmatpush1.msra.mxu0 0.0
    %1878 = vmatprep.subr.mxu0 0.0
    %1879 = vmatpush1.msra.mxu0 0.0
    %1880 = vmatprep.subr.mxu0 0.0
    %1881 = vmatpush1.msra.mxu0 0.0
    %1882 = vmatprep.subr.mxu0 0.0
    %1883 = vmatpush1.msra.mxu0 0.0
    %1884 = vmatprep.subr.mxu0 0.0
    %1885 = vmatpush1.msra.mxu0 0.0
    %1886 = vmatprep.subr.mxu0 0.0
    %1887 = vmatpush1.msra.mxu0 0.0
    %1888 = vmatprep.subr.mxu0 0.0
    %1889 = vmatpush1.msra.mxu0 0.0
    %1890 = vmatprep.subr.mxu0 0.0
    %1891 = vmatpush1.msra.mxu0 0.0
    %1892 = vmatprep.subr.mxu0 0.0
    %1893 = vmatpush1.msra.mxu0 0.0
    %1894 = vmatprep.subr.mxu0 0.0
    %1895 = vmatpush1.msra.mxu0 0.0
    %1896 = vmatprep.subr.mxu0 0.0
    %1897 = vmatpush1.msra.mxu0 0.0
    %1898 = vmatprep.subr.mxu0 0.0
    %1899 = vmatpush1.msra.mxu0 0.0
    %1900 = vmatprep.subr.mxu0 0.0
    %1901 = vmatpush1.msra.mxu0 0.0
    %1902 = vmatprep.mubr.f32.mxu0 0.0
    %1903 = vmatmul.mubr.f32.gmra.mrb[0].mxu0 %v103
    %v1904 = vpop.f32.mrb[0].mxu0
    %v1905 = vadd.f32 %v1837, %v1904
    %v1906 = vpop.f32.mrb[0].mxu0
    %1907 = vmatprep.mubr.f32.mxu0 0.0
    %1908 = vmatmul.mubr.f32.gmra.mrb[0].mxu0 %v104
    %v1909 = vpop.f32.mrb[0].mxu0
    %v1910 = vadd.f32 %v1837, %v1909
    %v1911 = vpop.f32.mrb[0].mxu0
    %1912 = vmatprep.mubr.f32.mxu0 0.0
    %1913 = vmatmul.mubr.f32.gmra.mrb[0].mxu0 %v105
    %v1914 = vpop.f32.mrb[0].mxu0
    %v1915 = vadd.f32 %v1837, %v1914
    %v1916 = vpop.f32.mrb[0].mxu0
    %1917 = vmatprep.mubr.f32.mxu0 0.0
    %1918 = vmatmul.mubr.f32.gmra.mrb[0].mxu0 %v106
    %v1919 = vpop.f32.mrb[0].mxu0
    %v1920 = vadd.f32 %v1837, %v1919
    %v1921 = vpop.f32.mrb[0].mxu0
    %1922 = vmatprep.mubr.f32.mxu0 0.0
    %1923 = vmatmul.mubr.f32.gmra.mrb[0].mxu0 %v107
    %v1924 = vpop.f32.mrb[0].mxu0
    %v1925 = vadd.f32 %v1837, %v1924
    %v1926 = vpop.f32.mrb[0].mxu0
    %1927 = vmatprep.mubr.f32.mxu0 0.0
    %1928 = vmatmul.mubr.f32.gmra.mrb[0].mxu0 %v108
    %v1929 = vpop.f32.mrb[0].mxu0
    %v1930 = vadd.f32 %v1837, %v1929
    %v1931 = vpop.f32.mrb[0].mxu0
    %1932 = vmatprep.mubr.f32.mxu0 0.0
    %1933 = vmatmul.mubr.f32.gmra.mrb[0].mxu0 %v109
    %v1934 = vpop.f32.mrb[0].mxu0
    %v1935 = vadd.f32 %v1837, %v1934
    %v1936 = vpop.f32.mrb[0].mxu0
    %1937 = vmatprep.mubr.f32.mxu0 0.0
    %1938 = vmatmul.mubr.f32.gmra.mrb[0].mxu0 %v110
    %v1939 = vpop.f32.mrb[0].mxu0
    %v1940 = vadd.f32 %v1837, %v1939
    %v1941 = vpop.f32.mrb[0].mxu0
    %1942 = vmatprep.mubr.f32.mxu0 0.0
    %1943 = vmatmul.mubr.f32.gmra.mrb[0].mxu0 %v111
    %v1944 = vpop.f32.mrb[0].mxu0
    %v1945 = vadd.f32 %v1837, %v1944
    %v1946 = vpop.f32.mrb[0].mxu0
    %1947 = vmatprep.mubr.f32.mxu0 0.0
    %1948 = vmatmul.mubr.f32.gmra.mrb[0].mxu0 %v112
    %v1949 = vpop.f32.mrb[0].mxu0
    %v1950 = vadd.f32 %v1837, %v1949
    %v1951 = vpop.f32.mrb[0].mxu0
    %1952 = vmatprep.mubr.f32.mxu0 0.0
    %1953 = vmatmul.mubr.f32.gmra.mrb[0].mxu0 %v113
    %v1954 = vpop.f32.mrb[0].mxu0
    %v1955 = vadd.f32 %v1837, %v1954
    %v1956 = vpop.f32.mrb[0].mxu0
    %1957 = vmatprep.mubr.f32.mxu0 0.0
    %1958 = vmatmul.mubr.f32.gmra.mrb[0].mxu0 %v114
    %v1959 = vpop.f32.mrb[0].mxu0
    %v1960 = vadd.f32 %v1837, %v1959
    %v1961 = vpop.f32.mrb[0].mxu0
    %1962 = vmatprep.mubr.f32.mxu0 0.0
    %1963 = vmatmul.mubr.f32.gmra.mrb[0].mxu0 %v115
    %v1964 = vpop.f32.mrb[0].mxu0
    %v1965 = vadd.f32 %v1837, %v1964
    %v1966 = vpop.f32.mrb[0].mxu0
    %1967 = vmatprep.mubr.f32.mxu0 0.0
    %1968 = vmatmul.mubr.f32.gmra.mrb[0].mxu0 %v116
    %v1969 = vpop.f32.mrb[0].mxu0
    %v1970 = vadd.f32 %v1837, %v1969
    %v1971 = vpop.f32.mrb[0].mxu0
    %1972 = vmatprep.mubr.f32.mxu0 0.0
    %1973 = vmatmul.mubr.f32.gmra.mrb[0].mxu0 %v117
    %v1974 = vpop.f32.mrb[0].mxu0
    %v1975 = vadd.f32 %v1837, %v1974
    %v1976 = vpop.f32.mrb[0].mxu0
    %1977 = vmatprep.mubr.f32.mxu0 0.0
    %1978 = vmatmul.mubr.f32.gmra.mrb[0].mxu0 %v118
    %v1979 = vpop.f32.mrb[0].mxu0
    %v1980 = vadd.f32 %v1837, %v1979
    %v1981 = vpop.f32.mrb[0].mxu0
    %1982 = vdwg.mxu0
    %v1983 = vld [vmem:[%s2] sm:$0x3]
    %v1984 = vlaneseq
    %v1985 = vshrl.u32 %v1984, 7
    %v1986 = vsub.s32 0, %v1985
    %v1987 = vrot.slane %v1983, %v1986
    %v1988 = vlaneseq
    %v1989 = vshrl.u32 %v1988, 7
    %v1990 = vsub.s32 1, %v1989
    %v1991 = vrot.slane %v1983, %v1990
    %vm1992 = vcmp.eq.s32.totalorder %v39, %v1987
    %vm1993 = vcmp.eq.s32.totalorder %v39, %v1991
    %vm1994 = vcmp.eq.s32.totalorder %v40, %v1987
    %vm1995 = vcmp.eq.s32.totalorder %v40, %v1991
    %vm1996 = vcmp.eq.s32.totalorder %v41, %v1987
    %vm1997 = vcmp.eq.s32.totalorder %v41, %v1991
    %vm1998 = vcmp.eq.s32.totalorder %v42, %v1987
    %vm1999 = vcmp.eq.s32.totalorder %v42, %v1991
    %vm2000 = vcmp.eq.s32.totalorder %v43, %v1987
    %vm2001 = vcmp.eq.s32.totalorder %v43, %v1991
    %vm2002 = vcmp.eq.s32.totalorder %v44, %v1987
    %vm2003 = vcmp.eq.s32.totalorder %v44, %v1991
    %vm2004 = vcmp.eq.s32.totalorder %v45, %v1987
    %vm2005 = vcmp.eq.s32.totalorder %v45, %v1991
    %vm2006 = vcmp.eq.s32.totalorder %v46, %v1987
    %vm2007 = vcmp.eq.s32.totalorder %v46, %v1991
    %vm2008 = vcmp.eq.s32.totalorder %v47, %v1987
    %vm2009 = vcmp.eq.s32.totalorder %v47, %v1991
    %vm2010 = vcmp.eq.s32.totalorder %v48, %v1987
    %vm2011 = vcmp.eq.s32.totalorder %v48, %v1991
    %vm2012 = vcmp.eq.s32.totalorder %v49, %v1987
    %vm2013 = vcmp.eq.s32.totalorder %v49, %v1991
    %vm2014 = vcmp.eq.s32.totalorder %v50, %v1987
    %vm2015 = vcmp.eq.s32.totalorder %v50, %v1991
    %vm2016 = vcmp.eq.s32.totalorder %v51, %v1987
    %vm2017 = vcmp.eq.s32.totalorder %v51, %v1991
    %vm2018 = vcmp.eq.s32.totalorder %v52, %v1987
    %vm2019 = vcmp.eq.s32.totalorder %v52, %v1991
    %vm2020 = vcmp.eq.s32.totalorder %v53, %v1987
    %vm2021 = vcmp.eq.s32.totalorder %v53, %v1991
    %vm2022 = vcmp.eq.s32.totalorder %v54, %v1987
    %vm2023 = vcmp.eq.s32.totalorder %v54, %v1991
    %v2024 = vsel %vm1992, 1, 0
    %v2025 = vsel %vm1993, 1, 0
    %v2026 = vsel %vm1994, 1, 0
    %v2027 = vsel %vm1995, 1, 0
    %v2028 = vsel %vm1996, 1, 0
    %v2029 = vsel %vm1997, 1, 0
    %v2030 = vsel %vm1998, 1, 0
    %v2031 = vsel %vm1999, 1, 0
    %v2032 = vsel %vm2000, 1, 0
    %v2033 = vsel %vm2001, 1, 0
    %v2034 = vsel %vm2002, 1, 0
    %v2035 = vsel %vm2003, 1, 0
    %v2036 = vsel %vm2004, 1, 0
    %v2037 = vsel %vm2005, 1, 0
    %v2038 = vsel %vm2006, 1, 0
    %v2039 = vsel %vm2007, 1, 0
    %v2040 = vsel %vm2008, 1, 0
    %v2041 = vsel %vm2009, 1, 0
    %v2042 = vsel %vm2010, 1, 0
    %v2043 = vsel %vm2011, 1, 0
    %v2044 = vsel %vm2012, 1, 0
    %v2045 = vsel %vm2013, 1, 0
    %v2046 = vsel %vm2014, 1, 0
    %v2047 = vsel %vm2015, 1, 0
    %v2048 = vsel %vm2016, 1, 0
    %v2049 = vsel %vm2017, 1, 0
    %v2050 = vsel %vm2018, 1, 0
    %v2051 = vsel %vm2019, 1, 0
    %v2052 = vsel %vm2020, 1, 0
    %v2053 = vsel %vm2021, 1, 0
    %v2054 = vsel %vm2022, 1, 0
    %v2055 = vsel %vm2023, 1, 0
    %v2056 = vcvt.s32.f32 %v2024
    %v2057 = vcvt.s32.f32 %v2025
    %v2058 = vcvt.s32.f32 %v2026
    %v2059 = vcvt.s32.f32 %v2027
    %v2060 = vcvt.s32.f32 %v2028
    %v2061 = vcvt.s32.f32 %v2029
    %v2062 = vcvt.s32.f32 %v2030
    %v2063 = vcvt.s32.f32 %v2031
    %v2064 = vcvt.s32.f32 %v2032
    %v2065 = vcvt.s32.f32 %v2033
    %v2066 = vcvt.s32.f32 %v2034
    %v2067 = vcvt.s32.f32 %v2035
    %v2068 = vcvt.s32.f32 %v2036
    %v2069 = vcvt.s32.f32 %v2037
    %v2070 = vcvt.s32.f32 %v2038
    %v2071 = vcvt.s32.f32 %v2039
    %v2072 = vcvt.s32.f32 %v2040
    %v2073 = vcvt.s32.f32 %v2041
    %v2074 = vcvt.s32.f32 %v2042
    %v2075 = vcvt.s32.f32 %v2043
    %v2076 = vcvt.s32.f32 %v2044
    %v2077 = vcvt.s32.f32 %v2045
    %v2078 = vcvt.s32.f32 %v2046
    %v2079 = vcvt.s32.f32 %v2047
    %v2080 = vcvt.s32.f32 %v2048
    %v2081 = vcvt.s32.f32 %v2049
    %v2082 = vcvt.s32.f32 %v2050
    %v2083 = vcvt.s32.f32 %v2051
    %v2084 = vcvt.s32.f32 %v2052
    %v2085 = vcvt.s32.f32 %v2053
    %v2086 = vcvt.s32.f32 %v2054
    %v2087 = vcvt.s32.f32 %v2055
    %2088 = vxpose.xlu0.b32.start [1/16] %v1905, 128
    %2089 = vxpose.xlu0.b32.cont [2/16] %v1910, 128
    %2090 = vxpose.xlu0.b32.cont [3/16] %v1915, 128
    %2091 = vxpose.xlu0.b32.cont [4/16] %v1920, 128
    %2092 = vxpose.xlu0.b32.cont [5/16] %v1925, 128
    %2093 = vxpose.xlu0.b32.cont [6/16] %v1930, 128
    %2094 = vxpose.xlu0.b32.cont [7/16] %v1935, 128
    %2095 = vxpose.xlu0.b32.cont [8/16] %v1940, 128
    %2096 = vxpose.xlu0.b32.cont [9/16] %v1945, 128
    %2097 = vxpose.xlu0.b32.cont [10/16] %v1950, 128
    %2098 = vxpose.xlu0.b32.cont [11/16] %v1955, 128
    %2099 = vxpose.xlu0.b32.cont [12/16] %v1960, 128
    %2100 = vxpose.xlu0.b32.cont [13/16] %v1965, 128
    %2101 = vxpose.xlu0.b32.cont [14/16] %v1970, 128
    %2102 = vxpose.xlu0.b32.cont [15/16] %v1975, 128
    %2103 = vxpose.xlu0.b32.end [16/16] %v1980, 128
    %v2104 = vpop.trf.xlu0
    %v2105 = vpop.trf.xlu0
    %v2106 = vpop.trf.xlu0
    %v2107 = vpop.trf.xlu0
    %v2108 = vpop.trf.xlu0
    %v2109 = vpop.trf.xlu0
    %v2110 = vpop.trf.xlu0
    %v2111 = vpop.trf.xlu0
    %v2112 = vpop.trf.xlu0
    %v2113 = vpop.trf.xlu0
    %v2114 = vpop.trf.xlu0
    %v2115 = vpop.trf.xlu0
    %v2116 = vpop.trf.xlu0
    %v2117 = vpop.trf.xlu0
    %v2118 = vpop.trf.xlu0
    %v2119 = vpop.trf.xlu0
    %2120 = vmatprep.subr.mxu0 %v2057
    %2121 = vmatpush1.msra.mxu0 %v2056
    %2122 = vmatprep.subr.mxu0 %v2059
    %2123 = vmatpush1.msra.mxu0 %v2058
    %2124 = vmatprep.subr.mxu0 %v2061
    %2125 = vmatpush1.msra.mxu0 %v2060
    %2126 = vmatprep.subr.mxu0 %v2063
    %2127 = vmatpush1.msra.mxu0 %v2062
    %2128 = vmatprep.subr.mxu0 %v2065
    %2129 = vmatpush1.msra.mxu0 %v2064
    %2130 = vmatprep.subr.mxu0 %v2067
    %2131 = vmatpush1.msra.mxu0 %v2066
    %2132 = vmatprep.subr.mxu0 %v2069
    %2133 = vmatpush1.msra.mxu0 %v2068
    %2134 = vmatprep.subr.mxu0 %v2071
    %2135 = vmatpush1.msra.mxu0 %v2070
    %2136 = vmatprep.subr.mxu0 %v2073
    %2137 = vmatpush1.msra.mxu0 %v2072
    %2138 = vmatprep.subr.mxu0 %v2075
    %2139 = vmatpush1.msra.mxu0 %v2074
    %2140 = vmatprep.subr.mxu0 %v2077
    %2141 = vmatpush1.msra.mxu0 %v2076
    %2142 = vmatprep.subr.mxu0 %v2079
    %2143 = vmatpush1.msra.mxu0 %v2078
    %2144 = vmatprep.subr.mxu0 %v2081
    %2145 = vmatpush1.msra.mxu0 %v2080
    %2146 = vmatprep.subr.mxu0 %v2083
    %2147 = vmatpush1.msra.mxu0 %v2082
    %2148 = vmatprep.subr.mxu0 %v2085
    %2149 = vmatpush1.msra.mxu0 %v2084
    %2150 = vmatprep.subr.mxu0 %v2087
    %2151 = vmatpush1.msra.mxu0 %v2086
    %2152 = vmatprep.subr.mxu0 0.0
    %2153 = vmatpush1.msra.mxu0 0.0
    %2154 = vmatprep.subr.mxu0 0.0
    %2155 = vmatpush1.msra.mxu0 0.0
    %2156 = vmatprep.subr.mxu0 0.0
    %2157 = vmatpush1.msra.mxu0 0.0
    %2158 = vmatprep.subr.mxu0 0.0
    %2159 = vmatpush1.msra.mxu0 0.0
    %2160 = vmatprep.subr.mxu0 0.0
    %2161 = vmatpush1.msra.mxu0 0.0
    %2162 = vmatprep.subr.mxu0 0.0
    %2163 = vmatpush1.msra.mxu0 0.0
    %2164 = vmatprep.subr.mxu0 0.0
    %2165 = vmatpush1.msra.mxu0 0.0
    %2166 = vmatprep.subr.mxu0 0.0
    %2167 = vmatpush1.msra.mxu0 0.0
    %2168 = vmatprep.subr.mxu0 0.0
    %2169 = vmatpush1.msra.mxu0 0.0
    %2170 = vmatprep.subr.mxu0 0.0
    %2171 = vmatpush1.msra.mxu0 0.0
    %2172 = vmatprep.subr.mxu0 0.0
    %2173 = vmatpush1.msra.mxu0 0.0
    %2174 = vmatprep.subr.mxu0 0.0
    %2175 = vmatpush1.msra.mxu0 0.0
    %2176 = vmatprep.subr.mxu0 0.0
    %2177 = vmatpush1.msra.mxu0 0.0
    %2178 = vmatprep.subr.mxu0 0.0
    %2179 = vmatpush1.msra.mxu0 0.0
    %2180 = vmatprep.subr.mxu0 0.0
    %2181 = vmatpush1.msra.mxu0 0.0
    %2182 = vmatprep.subr.mxu0 0.0
    %2183 = vmatpush1.msra.mxu0 0.0
    %2184 = vmatprep.mubr.f32.mxu0 0.0
    %2185 = vmatmul.mubr.f32.gmra.mrb[0].mxu0 %v2104
    %v2186 = vpop.f32.mrb[0].mxu0
    %v2187 = vadd.f32 0.0, %v2186
    %v2188 = vpop.f32.mrb[0].mxu0
    %v2189 = vadd.f32 0.0, %v2188
    %2190 = vmatprep.mubr.f32.mxu0 0.0
    %2191 = vmatmul.mubr.f32.gmra.mrb[0].mxu0 %v2105
    %v2192 = vpop.f32.mrb[0].mxu0
    %v2193 = vadd.f32 0.0, %v2192
    %v2194 = vpop.f32.mrb[0].mxu0
    %v2195 = vadd.f32 0.0, %v2194
    %2196 = vmatprep.mubr.f32.mxu0 0.0
    %2197 = vmatmul.mubr.f32.gmra.mrb[0].mxu0 %v2106
    %v2198 = vpop.f32.mrb[0].mxu0
    %v2199 = vadd.f32 0.0, %v2198
    %v2200 = vpop.f32.mrb[0].mxu0
    %v2201 = vadd.f32 0.0, %v2200
    %2202 = vmatprep.mubr.f32.mxu0 0.0
    %2203 = vmatmul.mubr.f32.gmra.mrb[0].mxu0 %v2107
    %v2204 = vpop.f32.mrb[0].mxu0
    %v2205 = vadd.f32 0.0, %v2204
    %v2206 = vpop.f32.mrb[0].mxu0
    %v2207 = vadd.f32 0.0, %v2206
    %2208 = vmatprep.mubr.f32.mxu0 0.0
    %2209 = vmatmul.mubr.f32.gmra.mrb[0].mxu0 %v2108
    %v2210 = vpop.f32.mrb[0].mxu0
    %v2211 = vadd.f32 0.0, %v2210
    %v2212 = vpop.f32.mrb[0].mxu0
    %v2213 = vadd.f32 0.0, %v2212
    %2214 = vmatprep.mubr.f32.mxu0 0.0
    %2215 = vmatmul.mubr.f32.gmra.mrb[0].mxu0 %v2109
    %v2216 = vpop.f32.mrb[0].mxu0
    %v2217 = vadd.f32 0.0, %v2216
    %v2218 = vpop.f32.mrb[0].mxu0
    %v2219 = vadd.f32 0.0, %v2218
    %2220 = vmatprep.mubr.f32.mxu0 0.0
    %2221 = vmatmul.mubr.f32.gmra.mrb[0].mxu0 %v2110
    %v2222 = vpop.f32.mrb[0].mxu0
    %v2223 = vadd.f32 0.0, %v2222
    %v2224 = vpop.f32.mrb[0].mxu0
    %v2225 = vadd.f32 0.0, %v2224
    %2226 = vmatprep.mubr.f32.mxu0 0.0
    %2227 = vmatmul.mubr.f32.gmra.mrb[0].mxu0 %v2111
    %v2228 = vpop.f32.mrb[0].mxu0
    %v2229 = vadd.f32 0.0, %v2228
    %v2230 = vpop.f32.mrb[0].mxu0
    %v2231 = vadd.f32 0.0, %v2230
    %2232 = vmatprep.mubr.f32.mxu0 0.0
    %2233 = vmatmul.mubr.f32.gmra.mrb[0].mxu0 %v2112
    %v2234 = vpop.f32.mrb[0].mxu0
    %v2235 = vadd.f32 0.0, %v2234
    %v2236 = vpop.f32.mrb[0].mxu0
    %v2237 = vadd.f32 0.0, %v2236
    %2238 = vmatprep.mubr.f32.mxu0 0.0
    %2239 = vmatmul.mubr.f32.gmra.mrb[0].mxu0 %v2113
    %v2240 = vpop.f32.mrb[0].mxu0
    %v2241 = vadd.f32 0.0, %v2240
    %v2242 = vpop.f32.mrb[0].mxu0
    %v2243 = vadd.f32 0.0, %v2242
    %2244 = vmatprep.mubr.f32.mxu0 0.0
    %2245 = vmatmul.mubr.f32.gmra.mrb[0].mxu0 %v2114
    %v2246 = vpop.f32.mrb[0].mxu0
    %v2247 = vadd.f32 0.0, %v2246
    %v2248 = vpop.f32.mrb[0].mxu0
    %v2249 = vadd.f32 0.0, %v2248
    %2250 = vmatprep.mubr.f32.mxu0 0.0
    %2251 = vmatmul.mubr.f32.gmra.mrb[0].mxu0 %v2115
    %v2252 = vpop.f32.mrb[0].mxu0
    %v2253 = vadd.f32 0.0, %v2252
    %v2254 = vpop.f32.mrb[0].mxu0
    %v2255 = vadd.f32 0.0, %v2254
    %2256 = vmatprep.mubr.f32.mxu0 0.0
    %2257 = vmatmul.mubr.f32.gmra.mrb[0].mxu0 %v2116
    %v2258 = vpop.f32.mrb[0].mxu0
    %v2259 = vadd.f32 0.0, %v2258
    %v2260 = vpop.f32.mrb[0].mxu0
    %v2261 = vadd.f32 0.0, %v2260
    %2262 = vmatprep.mubr.f32.mxu0 0.0
    %2263 = vmatmul.mubr.f32.gmra.mrb[0].mxu0 %v2117
    %v2264 = vpop.f32.mrb[0].mxu0
    %v2265 = vadd.f32 0.0, %v2264
    %v2266 = vpop.f32.mrb[0].mxu0
    %v2267 = vadd.f32 0.0, %v2266
    %2268 = vmatprep.mubr.f32.mxu0 0.0
    %2269 = vmatmul.mubr.f32.gmra.mrb[0].mxu0 %v2118
    %v2270 = vpop.f32.mrb[0].mxu0
    %v2271 = vadd.f32 0.0, %v2270
    %v2272 = vpop.f32.mrb[0].mxu0
    %v2273 = vadd.f32 0.0, %v2272
    %2274 = vmatprep.mubr.f32.mxu0 0.0
    %2275 = vmatmul.mubr.f32.gmra.mrb[0].mxu0 %v2119
    %v2276 = vpop.f32.mrb[0].mxu0
    %v2277 = vadd.f32 0.0, %v2276
    %v2278 = vpop.f32.mrb[0].mxu0
    %v2279 = vadd.f32 0.0, %v2278
    %2280 = vdwg.mxu0
    %v2281 = vmul.f32 %v2187, %v2189
    %v2282 = vmul.f32 %v2193, %v2195
    %v2283 = vmul.f32 %v2199, %v2201
    %v2284 = vmul.f32 %v2205, %v2207
    %v2285 = vmul.f32 %v2211, %v2213
    %v2286 = vmul.f32 %v2217, %v2219
    %v2287 = vmul.f32 %v2223, %v2225
    %v2288 = vmul.f32 %v2229, %v2231
    %v2289 = vmul.f32 %v2235, %v2237
    %v2290 = vmul.f32 %v2241, %v2243
    %v2291 = vmul.f32 %v2247, %v2249
    %v2292 = vmul.f32 %v2253, %v2255
    %v2293 = vmul.f32 %v2259, %v2261
    %v2294 = vmul.f32 %v2265, %v2267
    %v2295 = vmul.f32 %v2271, %v2273
    %v2296 = vmul.f32 %v2277, %v2279
    %v2297 = vadd.f32 %v2281, %v2282
    %v2298 = vadd.f32 %v2297, %v2283
    %v2299 = vadd.f32 %v2298, %v2284
    %v2300 = vadd.f32 %v2299, %v2285
    %v2301 = vadd.f32 %v2300, %v2286
    %v2302 = vadd.f32 %v2301, %v2287
    %v2303 = vadd.f32 %v2302, %v2288
    %v2304 = vadd.f32 %v2303, %v2289
    %v2305 = vadd.f32 %v2304, %v2290
    %v2306 = vadd.f32 %v2305, %v2291
    %v2307 = vadd.f32 %v2306, %v2292
    %v2308 = vadd.f32 %v2307, %v2293
    %v2309 = vadd.f32 %v2308, %v2294
    %v2310 = vadd.f32 %v2309, %v2295
    %v2311 = vadd.f32 %v2310, %v2296
    %v2312 = vrot.slane %v2311, 4
    %v2313 = vadd.f32 %v2311, %v2312
    %v2314 = vrot.slane %v2313, 2
    %v2315 = vadd.f32 %v2313, %v2314
    %v2316 = vrot.slane %v2315, 1
    %v2317 = vadd.f32 %v2315, %v2316
    %v2318 = vxor.u32 %v2317, 2147483648
    %v2319 = vmul.f32 %v2318, 1.442695
    %v2320 = vpow.pop %v2319
    %v2321 = vadd.f32 %v2320, 1.0
    %v2322 = vrcp.pop %v2321
    %v2323 = vmul.f32 1.0, %v2322
    %2324 = vst [vmem:[%s6] sm:$0x1] %v2323
    // Predicated region
    $region30: #{gcn_masker_forward.1} parent=1 // pred_check
      _
    $region31: #{gcn_masker_forward.1} parent=1 // pred_check_branch
      %2326 = sbr.rel (0) target = $region33
    $region32: #{gcn_masker_forward.1} parent=1 // pred_region
      _
    $region33: #{gcn_masker_forward.1} parent=1 // pred_fallthru
      _
    // Predicated region
    $region34: #{gcn_masker_forward.1} parent=1 // pred_check
      _
    $region35: #{gcn_masker_forward.1} parent=1 // pred_check_branch
      %2328 = sbr.rel (0) target = $region37
    $region36: #{gcn_masker_forward.1} parent=1 // pred_region
      _
    $region37: #{gcn_masker_forward.1} parent=1 // pred_fallthru
      _
    %2329 = vsyncpa [#allocation3], 1

</llo_original>
